<compile_context>
chip_gen: v6e
topology: v6e:2x2x1
jax: 0.10.0
libtpu: 0.0.40
codegen_flags: <defaults>
</compile_context>

<pallas_src>
import functools
import math

import jax
import jax.numpy as jnp
import numpy as np
from jax.experimental import pallas as pl
from jax.experimental.pallas import tpu as pltpu


# --------------------------------------------------------------------------------------
# Kernel A: attention core. grid=(B,), all H heads of one batch handled per grid step.
# Output block is the batch's 16 rows of the flat (B*N, D) tensor (lane-dense writeback).
# --------------------------------------------------------------------------------------
def _attn_kernel(qp_ref, k_ref, v_ref, e_ref, wblk_ref, o_ref,
                 pe_scr, ho_scr, *, n_heads, n_nodes, head_dim, norm):
    H, N, dh = n_heads, n_nodes, head_dim
    R = N // H            # flat output rows per head
    g = H                 # column chunks per flat row (= D // dh)

    # Edge projection for ALL heads with ONE MXU matmul (hoisted out of the head loop):
    #   pe_scr[k, h*N + m] = sum_f e[b, k, m, f] * we[h, f]
    # e operand is lane-dense (N, N*E); wblk is the host-built block-diagonal weight.
    pe_scr[...] = jnp.dot(e_ref[0], wblk_ref[...],
                          preferred_element_type=jnp.float32)

    for hh in range(H):                                        # tiny H -> unrolled
        q_h = qp_ref[0, hh]                                    # (N, dh)  row-permuted Q
        k_h = k_ref[0, hh]                                     # (dh, N)
        v_h = v_ref[0, hh]                                     # (N, dh)
        pe_h = pe_scr[:, hh * N:(hh + 1) * N]                  # (N, N)   [k, m]

        compat = norm * jnp.dot(q_h, k_h,
                                preferred_element_type=jnp.float32)       # (N, N) [p, m]
        # nc[p, k] = sum_m compat[p, m] * pe_h[k, m]   (contraction, no transpose)
        nc = jax.lax.dot_general(compat, pe_h, (((1,), (1,)), ((), ())),
                                 preferred_element_type=jnp.float32)      # (N, N) [p, k]
        z = nc - jnp.max(nc, axis=-1, keepdims=True)
        p = jnp.exp(z)
        inv = pl.reciprocal(jnp.sum(p, axis=-1, keepdims=True), approx=True)   # EUP slot
        scores = p * inv
        ho_scr[...] = jnp.dot(scores, v_h, preferred_element_type=jnp.float32)  # (N, dh)

        # Because Q rows were pre-permuted, this head's flat (R, D) output block is just
        # g contiguous (R, dh) slices of the scratch laid side by side on the lane axis.
        for j in range(g):
            o_ref[hh * R:(hh + 1) * R, j * dh:(j + 1) * dh] = \
                ho_scr[j * R:(j + 1) * R, :]


# --------------------------------------------------------------------------------------
# Kernel B: (fc . O_h) + residual + BN + FFN + residual + BN.  grid=() so the
# training-mode BatchNorm sees all B*N rows at once.
# --------------------------------------------------------------------------------------
def _post_kernel(attn_ref, hin_ref, who_ref, vec_ref, w1_ref, b1_ref, w2_ref, out_ref):
    eps = 1e-5
    bo, g1, be1 = vec_ref[0:1, :], vec_ref[1:2, :], vec_ref[2:3, :]
    b2, g2, be2 = vec_ref[3:4, :], vec_ref[4:5, :], vec_ref[5:6, :]

    # fused fc + O_h  (W_ho = wfc.T @ wo.T prefused on host; fc bias-free, dropout p=0)
    x = jnp.dot(attn_ref[...], who_ref[...],
                preferred_element_type=jnp.float32) + bo
    x = hin_ref[...] + x                                       # residual 1
    mu = jnp.mean(x, axis=0, keepdims=True)                    # BatchNorm1d #1 (batch stats)
    var = jnp.mean((x - mu) ** 2, axis=0, keepdims=True)
    x = (x - mu) * jax.lax.rsqrt(var + eps) * g1 + be1
    y = jnp.dot(x, w1_ref[...], preferred_element_type=jnp.float32) + b1_ref[...]
    y = jnp.maximum(y, 0.0)
    y = jnp.dot(y, w2_ref[...], preferred_element_type=jnp.float32) + b2
    y = x + y                                                  # residual 2
    mu2 = jnp.mean(y, axis=0, keepdims=True)                   # BatchNorm1d #2
    var2 = jnp.mean((y - mu2) ** 2, axis=0, keepdims=True)
    out_ref[...] = (y - mu2) * jax.lax.rsqrt(var2 + eps) * g2 + be2


# --------------------------------------------------------------------------------------
# One-time host-side weight preparation (run OUTSIDE jit, at parameter-load time).
# --------------------------------------------------------------------------------------
def prepare_params(params, n_nodes, n_heads=4):
    N, H = n_nodes, n_heads
    we = np.asarray(params["we"], np.float32)                  # (H, E) proj_e weight
    E = we.shape[1]
    # Block-diagonal edge weight so pe_all = e.reshape(N, N*E) @ wblk is one lane-dense
    # MXU matmul: wblk[m*E + f, h*N + m] = we[h, f].
    wblk = np.zeros((N * E, H * N), np.float32)
    for m in range(N):
        wblk[m * E:(m + 1) * E, m::N] = we.T
    return {
        "wqkv_t": jnp.concatenate([params["wq"].T, params["wk"].T, params["wv"].T],
                                  axis=1),                     # (D, 3D)
        "who_t": params["wfc"].T @ params["wo"].T,             # (D, D) exact prefusion
        "wblk": jnp.asarray(wblk),                             # (N*E, H*N)
        "vecs": jnp.stack([params["bo"], params["bn1_g"], params["bn1_b"],
                           params["b2"], params["bn2_g"], params["bn2_b"]],
                          axis=0).astype(jnp.float32),         # (6, D) packed vectors
        "w1_t": params["w1"].T,                                # (D, F)
        "b1": params["b1"][None, :],                           # (1, F)
        "w2_t": params["w2"].T,                                # (F, D)
    }


@functools.partial(jax.jit, static_argnames=("n_heads",))
def multi_head_attention_layer(h, e, prep, n_heads=4):
    B, N, D = h.shape
    E = e.shape[-1]
    H = n_heads
    assert D % H == 0 and N % H == 0
    dh = D // H
    R = N // H
    norm = 1.0 / math.sqrt(D / H)                 # 1/sqrt(head_dim), head_dim is a float

    h2d = h.reshape(B * N, D)

    # --- QKV projection + the module's flat .view reinterpretations stay in XLA ---
    # (one fused matmul + metadata reshapes; no dedicated pallas_call / HBM round trip)
    qkv = jnp.dot(h2d, prep["wqkv_t"], preferred_element_type=jnp.float32)   # (B*N, 3D)
    q3 = qkv[:, :D].reshape(B, H, N, dh)          # exact torch .view/.reshape semantics
    k3 = qkv[:, D:2 * D].reshape(B, H, dh, N)
    v3 = qkv[:, 2 * D:].reshape(B, H, N, dh)
    # Pre-permute Q rows so each head's flat (B*N, D) output rows are built from
    # contiguous slices inside the kernel (no in-kernel reshape / relayout needed).
    qp = q3.reshape(B, H, R, H, dh).transpose(0, 1, 3, 2, 4).reshape(B, H, N, dh)
    e2 = e.reshape(B, N, N * E)                   # lane-dense edge operand (free reshape)

    # --- Kernel A: attention; grid=(B,), "parallel" (v7x: one batch per TensorCore) ---
    attn_flat = pl.pallas_call(
        functools.partial(_attn_kernel, n_heads=H, n_nodes=N, head_dim=dh, norm=norm),
        grid=(B,),
        in_specs=[
            pl.BlockSpec((1, H, N, dh), lambda b: (b, 0, 0, 0)),
            pl.BlockSpec((1, H, dh, N), lambda b: (b, 0, 0, 0)),
            pl.BlockSpec((1, H, N, dh), lambda b: (b, 0, 0, 0)),
            pl.BlockSpec((1, N, N * E), lambda b: (b, 0, 0)),
            pl.BlockSpec((N * E, H * N), lambda b: (0, 0)),
        ],
        out_specs=pl.BlockSpec((N, D), lambda b: (b, 0)),
        out_shape=jax.ShapeDtypeStruct((B * N, D), jnp.float32),
        scratch_shapes=[pltpu.VMEM((N, H * N), jnp.float32),   # pe for all heads
                        pltpu.VMEM((N, dh), jnp.float32)],     # per-head output staging
        compiler_params=pltpu.CompilerParams(
            dimension_semantics=("parallel",),
            vmem_limit_bytes=32 * 1024 * 1024),
    )(qp, k3, v3, e2, prep["wblk"])

    # --- Kernel B: post block; grid=() so BatchNorm sees all B*N rows at once ---
    vmem = pl.BlockSpec(memory_space=pltpu.MemorySpace.VMEM)
    out = pl.pallas_call(
        _post_kernel,
        in_specs=[vmem] * 7,
        out_specs=vmem,
        out_shape=jax.ShapeDtypeStruct((B * N, D), jnp.float32),
        compiler_params=pltpu.CompilerParams(vmem_limit_bytes=32 * 1024 * 1024),
    )(attn_flat, h2d, prep["who_t"], prep["vecs"],
      prep["w1_t"], prep["b1"], prep["w2_t"])
    return out


# ---------------- pure-JAX reference (mirrors the PyTorch forward) ----------------
def reference(h, e, params, n_heads=4):
    B, N, D = h.shape
    H = n_heads
    dh = D // H
    norm = 1.0 / math.sqrt(D / H)
    Q = h @ params["wq"].T
    K = h @ params["wk"].T
    V = h @ params["wv"].T
    Pe = e @ params["we"].T
    Qr = Q.reshape(B, H, N, dh)
    Kr = K.reshape(B, H, dh, N)
    Vr = V.reshape(B, H, N, dh)
    compat = norm * jnp.einsum("bhnd,bhdm->bhnm", Qr, Kr)
    PeT = jnp.transpose(Pe, (0, 3, 2, 1))
    nc = jnp.einsum("bhnm,bhmk->bhnk", compat, PeT)
    scores = jax.nn.softmax(nc, axis=-1)
    out = jnp.einsum("bhnm,bhmd->bhnd", scores, Vr).reshape(-1, D)
    out = out @ params["wfc"].T
    x = out @ params["wo"].T + params["bo"]
    x = h.reshape(-1, D) + x

    def bn(z, g, b):
        mu = z.mean(0)
        var = ((z - mu) ** 2).mean(0)
        return (z - mu) / jnp.sqrt(var + 1e-5) * g + b

    x = bn(x, params["bn1_g"], params["bn1_b"])
    h_in2 = x
    y = jax.nn.relu(x @ params["w1"].T + params["b1"])
    y = y @ params["w2"].T + params["b2"]
    y = h_in2 + y
    return bn(y, params["bn2_g"], params["bn2_b"])


if __name__ == "__main__":
    B, N, D, E = 2, 16, 32, 16       # batch, n_nodes, hidden_node_dim, hidden_edge_dim
    H = 4                             # n_heads
    F = 512                           # feed_forward_hidden

    key = jax.random.PRNGKey(0)
    keys = jax.random.split(key, 16)

    params = {
        "wq": 0.1 * jax.random.normal(keys[0], (D, D), jnp.float32),
        "wk": 0.1 * jax.random.normal(keys[1], (D, D), jnp.float32),
        "wv": 0.1 * jax.random.normal(keys[2], (D, D), jnp.float32),
        "we": 0.1 * jax.random.normal(keys[3], (H, E), jnp.float32),   # proj_e (n_heads, E)
        "wfc": 0.1 * jax.random.normal(keys[4], (D, D), jnp.float32),
        "wo": 0.1 * jax.random.normal(keys[5], (D, D), jnp.float32),
        "bo": 0.1 * jax.random.normal(keys[6], (D,), jnp.float32),
        "bn1_g": 1.0 + 0.1 * jax.random.normal(keys[7], (D,), jnp.float32),
        "bn1_b": 0.1 * jax.random.normal(keys[8], (D,), jnp.float32),
        "w1": 0.1 * jax.random.normal(keys[9], (F, D), jnp.float32),
        "b1": 0.1 * jax.random.normal(keys[10], (F,), jnp.float32),
        "w2": 0.1 * jax.random.normal(keys[11], (D, F), jnp.float32),
        "b2": 0.1 * jax.random.normal(keys[12], (D,), jnp.float32),
        "bn2_g": 1.0 + 0.1 * jax.random.normal(keys[13], (D,), jnp.float32),
        "bn2_b": 0.1 * jax.random.normal(keys[14], (D,), jnp.float32),
    }

    hk, ek = jax.random.split(keys[15])
    h = jax.random.normal(hk, (B, N, D), jnp.float32)
    e = jax.random.normal(ek, (B, N, N, E), jnp.float32)

    prep = prepare_params(params, n_nodes=N, n_heads=H)        # once, outside jit

    out = multi_head_attention_layer(h, e, prep, n_heads=H)
    out = jax.block_until_ready(out)

    ref = jax.block_until_ready(reference(h, e, params, n_heads=H))
    np.testing.assert_allclose(np.asarray(out), np.asarray(ref), rtol=2e-3, atol=2e-3)

    print("KERNEL_OK")
</pallas_src>

<mosaic_0001>
module attributes {stable_mosaic.version = 11 : i64} {
  func.func @_attn_kernel(%arg0: i32, %arg1: memref<1x4x16x8xf32, #tpu.memory_space<vmem>>, %arg2: memref<1x4x8x16xf32, #tpu.memory_space<vmem>>, %arg3: memref<1x4x16x8xf32, #tpu.memory_space<vmem>>, %arg4: memref<1x16x256xf32, #tpu.memory_space<vmem>>, %arg5: memref<256x64xf32, #tpu.memory_space<vmem>>, %arg6: memref<16x32xf32, #tpu.memory_space<vmem>>, %arg7: memref<16x64xf32, #tpu.memory_space<vmem>>, %arg8: memref<16x8xf32, #tpu.memory_space<vmem>>) attributes {dimension_semantics = [#tpu.dimension_semantics<parallel>], iteration_bounds = array<i64: 2>, scalar_prefetch = 0 : i64, scratch_operands = 2 : i64, tpu.core_type = #tpu.core_type<tc>, window_params = [{transform_indices = @transform_0, window_bounds = array<i64: 1, 4, 16, 8>}, {transform_indices = @transform_1, window_bounds = array<i64: 1, 4, 8, 16>}, {transform_indices = @transform_2, window_bounds = array<i64: 1, 4, 16, 8>}, {transform_indices = @transform_3, window_bounds = array<i64: 1, 16, 256>}, {pipeline_mode = #tpu.pipeline_mode<synchronous>, transform_indices = @transform_4, window_bounds = array<i64: 256, 64>}, {transform_indices = @transform_5, window_bounds = array<i64: 16, 32>}]} {
    %c0 = arith.constant 0 : index
    %c0_0 = arith.constant 0 : index
    %c0_1 = arith.constant 0 : index
    %0 = vector.load %arg4[%c0, %c0_0, %c0_1] : memref<1x16x256xf32, #tpu.memory_space<vmem>>, vector<1x16x256xf32>
    %1 = vector.shape_cast %0 : vector<1x16x256xf32> to vector<16x256xf32>
    %c0_2 = arith.constant 0 : index
    %c0_3 = arith.constant 0 : index
    %2 = vector.load %arg5[%c0_2, %c0_3] : memref<256x64xf32, #tpu.memory_space<vmem>>, vector<256x64xf32>
    %cst = arith.constant dense<0.000000e+00> : vector<16x64xf32>
    %3 = tpu.matmul %1, %2, %cst {dimension_numbers = #tpu.dot_dimension_numbers<[1], [0], [0], [1], [0, 0, 1, 1], [], []>} : vector<16x256xf32>, vector<256x64xf32>, vector<16x64xf32> -> vector<16x64xf32>
    %c0_4 = arith.constant 0 : index
    %c0_5 = arith.constant 0 : index
    %4 = vector.load %arg7[%c0_4, %c0_5] : memref<16x64xf32, #tpu.memory_space<vmem>>, vector<16x64xf32>
    tpu.vector_store %arg7[%c0_4, %c0_5], %3 {strides = array<i32>} : memref<16x64xf32, #tpu.memory_space<vmem>>, vector<16x64xf32>,
    %c0_6 = arith.constant 0 : index
    %c0_7 = arith.constant 0 : index
    %c0_8 = arith.constant 0 : index
    %c0_9 = arith.constant 0 : index
    %5 = vector.load %arg1[%c0_6, %c0_7, %c0_8, %c0_9] : memref<1x4x16x8xf32, #tpu.memory_space<vmem>>, vector<1x1x16x8xf32>
    %6 = vector.shape_cast %5 : vector<1x1x16x8xf32> to vector<16x8xf32>
    %c0_10 = arith.constant 0 : index
    %c0_11 = arith.constant 0 : index
    %c0_12 = arith.constant 0 : index
    %c0_13 = arith.constant 0 : index
    %7 = vector.load %arg2[%c0_10, %c0_11, %c0_12, %c0_13] : memref<1x4x8x16xf32, #tpu.memory_space<vmem>>, vector<1x1x8x16xf32>
    %8 = vector.shape_cast %7 : vector<1x1x8x16xf32> to vector<8x16xf32>
    %c0_14 = arith.constant 0 : index
    %c0_15 = arith.constant 0 : index
    %c0_16 = arith.constant 0 : index
    %c0_17 = arith.constant 0 : index
    %9 = vector.load %arg3[%c0_14, %c0_15, %c0_16, %c0_17] : memref<1x4x16x8xf32, #tpu.memory_space<vmem>>, vector<1x1x16x8xf32>
    %10 = vector.shape_cast %9 : vector<1x1x16x8xf32> to vector<16x8xf32>
    %c0_18 = arith.constant 0 : index
    %c0_19 = arith.constant 0 : index
    %11 = vector.load %arg7[%c0_18, %c0_19] : memref<16x64xf32, #tpu.memory_space<vmem>>, vector<16x16xf32>
    %cst_20 = arith.constant dense<0.000000e+00> : vector<16x16xf32>
    %12 = tpu.matmul %6, %8, %cst_20 {dimension_numbers = #tpu.dot_dimension_numbers<[1], [0], [0], [1], [0, 0, 1, 1], [], []>} : vector<16x8xf32>, vector<8x16xf32>, vector<16x16xf32> -> vector<16x16xf32>
    %cst_21 = arith.constant 0.353553385 : f32
    %13 = vector.broadcast %cst_21 : f32 to vector<16x16xf32>
    %14 = arith.mulf %13, %12 : vector<16x16xf32>
    %cst_22 = arith.constant dense<0.000000e+00> : vector<16x16xf32>
    %15 = tpu.matmul %14, %11, %cst_22 {dimension_numbers = #tpu.dot_dimension_numbers<[1], [1], [0], [0], [0, 0, 1, 0], [], []>} : vector<16x16xf32>, vector<16x16xf32>, vector<16x16xf32> -> vector<16x16xf32>
    %cst_23 = arith.constant dense<0xFF800000> : vector<16xf32>
    %16 = vector.multi_reduction <maximumf>, %15, %cst_23 [1] : vector<16x16xf32> to vector<16xf32>
    %17 = vector.shape_cast %16 : vector<16xf32> to vector<16x1xf32>
    %18 = vector.broadcast %17 : vector<16x1xf32> to vector<16x16xf32>
    %19 = arith.subf %15, %18 : vector<16x16xf32>
    %20 = math.exp %19 : vector<16x16xf32>
    %cst_24 = arith.constant dense<0.000000e+00> : vector<16xf32>
    %21 = vector.multi_reduction <add>, %20, %cst_24 [1] : vector<16x16xf32> to vector<16xf32>
    %22 = vector.shape_cast %21 : vector<16xf32> to vector<16x1xf32>
    %23 = tpu.reciprocal %22 {approx = true} : vector<16x1xf32> -> vector<16x1xf32>
    %24 = vector.broadcast %23 : vector<16x1xf32> to vector<16x16xf32>
    %25 = arith.mulf %20, %24 : vector<16x16xf32>
    %cst_25 = arith.constant dense<0.000000e+00> : vector<16x8xf32>
    %26 = tpu.matmul %25, %10, %cst_25 {dimension_numbers = #tpu.dot_dimension_numbers<[1], [0], [0], [1], [0, 0, 1, 1], [], []>} : vector<16x16xf32>, vector<16x8xf32>, vector<16x8xf32> -> vector<16x8xf32>
    %c0_26 = arith.constant 0 : index
    %c0_27 = arith.constant 0 : index
    %27 = vector.load %arg8[%c0_26, %c0_27] : memref<16x8xf32, #tpu.memory_space<vmem>>, vector<16x8xf32>
    tpu.vector_store %arg8[%c0_26, %c0_27], %26 {strides = array<i32>} : memref<16x8xf32, #tpu.memory_space<vmem>>, vector<16x8xf32>,
    %c0_28 = arith.constant 0 : index
    %c0_29 = arith.constant 0 : index
    %28 = vector.load %arg8[%c0_28, %c0_29] : memref<16x8xf32, #tpu.memory_space<vmem>>, vector<4x8xf32>
    %c0_30 = arith.constant 0 : index
    %c0_31 = arith.constant 0 : index
    %29 = vector.load %arg6[%c0_30, %c0_31] : memref<16x32xf32, #tpu.memory_space<vmem>>, vector<4x8xf32>
    tpu.vector_store %arg6[%c0_30, %c0_31], %28 {strides = array<i32>} : memref<16x32xf32, #tpu.memory_space<vmem>>, vector<4x8xf32>,
    %c4 = arith.constant 4 : index
    %c0_32 = arith.constant 0 : index
    %30 = vector.load %arg8[%c4, %c0_32] : memref<16x8xf32, #tpu.memory_space<vmem>>, vector<4x8xf32>
    %c0_33 = arith.constant 0 : index
    %c8 = arith.constant 8 : index
    %31 = vector.load %arg6[%c0_33, %c8] : memref<16x32xf32, #tpu.memory_space<vmem>>, vector<4x8xf32>
    tpu.vector_store %arg6[%c0_33, %c8], %30 {strides = array<i32>} : memref<16x32xf32, #tpu.memory_space<vmem>>, vector<4x8xf32>,
    %c8_34 = arith.constant 8 : index
    %c0_35 = arith.constant 0 : index
    %32 = vector.load %arg8[%c8_34, %c0_35] : memref<16x8xf32, #tpu.memory_space<vmem>>, vector<4x8xf32>
    %c0_36 = arith.constant 0 : index
    %c16 = arith.constant 16 : index
    %33 = vector.load %arg6[%c0_36, %c16] : memref<16x32xf32, #tpu.memory_space<vmem>>, vector<4x8xf32>
    tpu.vector_store %arg6[%c0_36, %c16], %32 {strides = array<i32>} : memref<16x32xf32, #tpu.memory_space<vmem>>, vector<4x8xf32>,
    %c12 = arith.constant 12 : index
    %c0_37 = arith.constant 0 : index
    %34 = vector.load %arg8[%c12, %c0_37] : memref<16x8xf32, #tpu.memory_space<vmem>>, vector<4x8xf32>
    %c0_38 = arith.constant 0 : index
    %c24 = arith.constant 24 : index
    %35 = vector.load %arg6[%c0_38, %c24] : memref<16x32xf32, #tpu.memory_space<vmem>>, vector<4x8xf32>
    tpu.vector_store %arg6[%c0_38, %c24], %34 {strides = array<i32>} : memref<16x32xf32, #tpu.memory_space<vmem>>, vector<4x8xf32>,
    %c0_39 = arith.constant 0 : index
    %c1 = arith.constant 1 : index
    %c0_40 = arith.constant 0 : index
    %c0_41 = arith.constant 0 : index
    %36 = vector.load %arg1[%c0_39, %c1, %c0_40, %c0_41] : memref<1x4x16x8xf32, #tpu.memory_space<vmem>>, vector<1x1x16x8xf32>
    %37 = vector.shape_cast %36 : vector<1x1x16x8xf32> to vector<16x8xf32>
    %c0_42 = arith.constant 0 : index
    %c1_43 = arith.constant 1 : index
    %c0_44 = arith.constant 0 : index
    %c0_45 = arith.constant 0 : index
    %38 = vector.load %arg2[%c0_42, %c1_43, %c0_44, %c0_45] : memref<1x4x8x16xf32, #tpu.memory_space<vmem>>, vector<1x1x8x16xf32>
    %39 = vector.shape_cast %38 : vector<1x1x8x16xf32> to vector<8x16xf32>
    %c0_46 = arith.constant 0 : index
    %c1_47 = arith.constant 1 : index
    %c0_48 = arith.constant 0 : index
    %c0_49 = arith.constant 0 : index
    %40 = vector.load %arg3[%c0_46, %c1_47, %c0_48, %c0_49] : memref<1x4x16x8xf32, #tpu.memory_space<vmem>>, vector<1x1x16x8xf32>
    %41 = vector.shape_cast %40 : vector<1x1x16x8xf32> to vector<16x8xf32>
    %c0_50 = arith.constant 0 : index
    %c16_51 = arith.constant 16 : index
    %42 = vector.load %arg7[%c0_50, %c16_51] : memref<16x64xf32, #tpu.memory_space<vmem>>, vector<16x16xf32>
    %cst_52 = arith.constant dense<0.000000e+00> : vector<16x16xf32>
    %43 = tpu.matmul %37, %39, %cst_52 {dimension_numbers = #tpu.dot_dimension_numbers<[1], [0], [0], [1], [0, 0, 1, 1], [], []>} : vector<16x8xf32>, vector<8x16xf32>, vector<16x16xf32> -> vector<16x16xf32>
    %cst_53 = arith.constant 0.353553385 : f32
    %44 = vector.broadcast %cst_53 : f32 to vector<16x16xf32>
    %45 = arith.mulf %44, %43 : vector<16x16xf32>
    %cst_54 = arith.constant dense<0.000000e+00> : vector<16x16xf32>
    %46 = tpu.matmul %45, %42, %cst_54 {dimension_numbers = #tpu.dot_dimension_numbers<[1], [1], [0], [0], [0, 0, 1, 0], [], []>} : vector<16x16xf32>, vector<16x16xf32>, vector<16x16xf32> -> vector<16x16xf32>
    %cst_55 = arith.constant dense<0xFF800000> : vector<16xf32>
    %47 = vector.multi_reduction <maximumf>, %46, %cst_55 [1] : vector<16x16xf32> to vector<16xf32>
    %48 = vector.shape_cast %47 : vector<16xf32> to vector<16x1xf32>
    %49 = vector.broadcast %48 : vector<16x1xf32> to vector<16x16xf32>
    %50 = arith.subf %46, %49 : vector<16x16xf32>
    %51 = math.exp %50 : vector<16x16xf32>
    %cst_56 = arith.constant dense<0.000000e+00> : vector<16xf32>
    %52 = vector.multi_reduction <add>, %51, %cst_56 [1] : vector<16x16xf32> to vector<16xf32>
    %53 = vector.shape_cast %52 : vector<16xf32> to vector<16x1xf32>
    %54 = tpu.reciprocal %53 {approx = true} : vector<16x1xf32> -> vector<16x1xf32>
    %55 = vector.broadcast %54 : vector<16x1xf32> to vector<16x16xf32>
    %56 = arith.mulf %51, %55 : vector<16x16xf32>
    %cst_57 = arith.constant dense<0.000000e+00> : vector<16x8xf32>
    %57 = tpu.matmul %56, %41, %cst_57 {dimension_numbers = #tpu.dot_dimension_numbers<[1], [0], [0], [1], [0, 0, 1, 1], [], []>} : vector<16x16xf32>, vector<16x8xf32>, vector<16x8xf32> -> vector<16x8xf32>
    %c0_58 = arith.constant 0 : index
    %c0_59 = arith.constant 0 : index
    %58 = vector.load %arg8[%c0_58, %c0_59] : memref<16x8xf32, #tpu.memory_space<vmem>>, vector<16x8xf32>
    tpu.vector_store %arg8[%c0_58, %c0_59], %57 {strides = array<i32>} : memref<16x8xf32, #tpu.memory_space<vmem>>, vector<16x8xf32>,
    %c0_60 = arith.constant 0 : index
    %c0_61 = arith.constant 0 : index
    %59 = vector.load %arg8[%c0_60, %c0_61] : memref<16x8xf32, #tpu.memory_space<vmem>>, vector<4x8xf32>
    %c4_62 = arith.constant 4 : index
    %c0_63 = arith.constant 0 : index
    %60 = vector.load %arg6[%c4_62, %c0_63] : memref<16x32xf32, #tpu.memory_space<vmem>>, vector<4x8xf32>
    tpu.vector_store %arg6[%c4_62, %c0_63], %59 {strides = array<i32>} : memref<16x32xf32, #tpu.memory_space<vmem>>, vector<4x8xf32>,
    %c4_64 = arith.constant 4 : index
    %c0_65 = arith.constant 0 : index
    %61 = vector.load %arg8[%c4_64, %c0_65] : memref<16x8xf32, #tpu.memory_space<vmem>>, vector<4x8xf32>
    %c4_66 = arith.constant 4 : index
    %c8_67 = arith.constant 8 : index
    %62 = vector.load %arg6[%c4_66, %c8_67] : memref<16x32xf32, #tpu.memory_space<vmem>>, vector<4x8xf32>
    tpu.vector_store %arg6[%c4_66, %c8_67], %61 {strides = array<i32>} : memref<16x32xf32, #tpu.memory_space<vmem>>, vector<4x8xf32>,
    %c8_68 = arith.constant 8 : index
    %c0_69 = arith.constant 0 : index
    %63 = vector.load %arg8[%c8_68, %c0_69] : memref<16x8xf32, #tpu.memory_space<vmem>>, vector<4x8xf32>
    %c4_70 = arith.constant 4 : index
    %c16_71 = arith.constant 16 : index
    %64 = vector.load %arg6[%c4_70, %c16_71] : memref<16x32xf32, #tpu.memory_space<vmem>>, vector<4x8xf32>
    tpu.vector_store %arg6[%c4_70, %c16_71], %63 {strides = array<i32>} : memref<16x32xf32, #tpu.memory_space<vmem>>, vector<4x8xf32>,
    %c12_72 = arith.constant 12 : index
    %c0_73 = arith.constant 0 : index
    %65 = vector.load %arg8[%c12_72, %c0_73] : memref<16x8xf32, #tpu.memory_space<vmem>>, vector<4x8xf32>
    %c4_74 = arith.constant 4 : index
    %c24_75 = arith.constant 24 : index
    %66 = vector.load %arg6[%c4_74, %c24_75] : memref<16x32xf32, #tpu.memory_space<vmem>>, vector<4x8xf32>
    tpu.vector_store %arg6[%c4_74, %c24_75], %65 {strides = array<i32>} : memref<16x32xf32, #tpu.memory_space<vmem>>, vector<4x8xf32>,
    %c0_76 = arith.constant 0 : index
    %c2 = arith.constant 2 : index
    %c0_77 = arith.constant 0 : index
    %c0_78 = arith.constant 0 : index
    %67 = vector.load %arg1[%c0_76, %c2, %c0_77, %c0_78] : memref<1x4x16x8xf32, #tpu.memory_space<vmem>>, vector<1x1x16x8xf32>
    %68 = vector.shape_cast %67 : vector<1x1x16x8xf32> to vector<16x8xf32>
    %c0_79 = arith.constant 0 : index
    %c2_80 = arith.constant 2 : index
    %c0_81 = arith.constant 0 : index
    %c0_82 = arith.constant 0 : index
    %69 = vector.load %arg2[%c0_79, %c2_80, %c0_81, %c0_82] : memref<1x4x8x16xf32, #tpu.memory_space<vmem>>, vector<1x1x8x16xf32>
    %70 = vector.shape_cast %69 : vector<1x1x8x16xf32> to vector<8x16xf32>
    %c0_83 = arith.constant 0 : index
    %c2_84 = arith.constant 2 : index
    %c0_85 = arith.constant 0 : index
    %c0_86 = arith.constant 0 : index
    %71 = vector.load %arg3[%c0_83, %c2_84, %c0_85, %c0_86] : memref<1x4x16x8xf32, #tpu.memory_space<vmem>>, vector<1x1x16x8xf32>
    %72 = vector.shape_cast %71 : vector<1x1x16x8xf32> to vector<16x8xf32>
    %c0_87 = arith.constant 0 : index
    %c32 = arith.constant 32 : index
    %73 = vector.load %arg7[%c0_87, %c32] : memref<16x64xf32, #tpu.memory_space<vmem>>, vector<16x16xf32>
    %cst_88 = arith.constant dense<0.000000e+00> : vector<16x16xf32>
    %74 = tpu.matmul %68, %70, %cst_88 {dimension_numbers = #tpu.dot_dimension_numbers<[1], [0], [0], [1], [0, 0, 1, 1], [], []>} : vector<16x8xf32>, vector<8x16xf32>, vector<16x16xf32> -> vector<16x16xf32>
    %cst_89 = arith.constant 0.353553385 : f32
    %75 = vector.broadcast %cst_89 : f32 to vector<16x16xf32>
    %76 = arith.mulf %75, %74 : vector<16x16xf32>
    %cst_90 = arith.constant dense<0.000000e+00> : vector<16x16xf32>
    %77 = tpu.matmul %76, %73, %cst_90 {dimension_numbers = #tpu.dot_dimension_numbers<[1], [1], [0], [0], [0, 0, 1, 0], [], []>} : vector<16x16xf32>, vector<16x16xf32>, vector<16x16xf32> -> vector<16x16xf32>
    %cst_91 = arith.constant dense<0xFF800000> : vector<16xf32>
    %78 = vector.multi_reduction <maximumf>, %77, %cst_91 [1] : vector<16x16xf32> to vector<16xf32>
    %79 = vector.shape_cast %78 : vector<16xf32> to vector<16x1xf32>
    %80 = vector.broadcast %79 : vector<16x1xf32> to vector<16x16xf32>
    %81 = arith.subf %77, %80 : vector<16x16xf32>
    %82 = math.exp %81 : vector<16x16xf32>
    %cst_92 = arith.constant dense<0.000000e+00> : vector<16xf32>
    %83 = vector.multi_reduction <add>, %82, %cst_92 [1] : vector<16x16xf32> to vector<16xf32>
    %84 = vector.shape_cast %83 : vector<16xf32> to vector<16x1xf32>
    %85 = tpu.reciprocal %84 {approx = true} : vector<16x1xf32> -> vector<16x1xf32>
    %86 = vector.broadcast %85 : vector<16x1xf32> to vector<16x16xf32>
    %87 = arith.mulf %82, %86 : vector<16x16xf32>
    %cst_93 = arith.constant dense<0.000000e+00> : vector<16x8xf32>
    %88 = tpu.matmul %87, %72, %cst_93 {dimension_numbers = #tpu.dot_dimension_numbers<[1], [0], [0], [1], [0, 0, 1, 1], [], []>} : vector<16x16xf32>, vector<16x8xf32>, vector<16x8xf32> -> vector<16x8xf32>
    %c0_94 = arith.constant 0 : index
    %c0_95 = arith.constant 0 : index
    %89 = vector.load %arg8[%c0_94, %c0_95] : memref<16x8xf32, #tpu.memory_space<vmem>>, vector<16x8xf32>
    tpu.vector_store %arg8[%c0_94, %c0_95], %88 {strides = array<i32>} : memref<16x8xf32, #tpu.memory_space<vmem>>, vector<16x8xf32>,
    %c0_96 = arith.constant 0 : index
    %c0_97 = arith.constant 0 : index
    %90 = vector.load %arg8[%c0_96, %c0_97] : memref<16x8xf32, #tpu.memory_space<vmem>>, vector<4x8xf32>
    %c8_98 = arith.constant 8 : index
    %c0_99 = arith.constant 0 : index
    %91 = vector.load %arg6[%c8_98, %c0_99] : memref<16x32xf32, #tpu.memory_space<vmem>>, vector<4x8xf32>
    tpu.vector_store %arg6[%c8_98, %c0_99], %90 {strides = array<i32>} : memref<16x32xf32, #tpu.memory_space<vmem>>, vector<4x8xf32>,
    %c4_100 = arith.constant 4 : index
    %c0_101 = arith.constant 0 : index
    %92 = vector.load %arg8[%c4_100, %c0_101] : memref<16x8xf32, #tpu.memory_space<vmem>>, vector<4x8xf32>
    %c8_102 = arith.constant 8 : index
    %c8_103 = arith.constant 8 : index
    %93 = vector.load %arg6[%c8_102, %c8_103] : memref<16x32xf32, #tpu.memory_space<vmem>>, vector<4x8xf32>
    tpu.vector_store %arg6[%c8_102, %c8_103], %92 {strides = array<i32>} : memref<16x32xf32, #tpu.memory_space<vmem>>, vector<4x8xf32>,
    %c8_104 = arith.constant 8 : index
    %c0_105 = arith.constant 0 : index
    %94 = vector.load %arg8[%c8_104, %c0_105] : memref<16x8xf32, #tpu.memory_space<vmem>>, vector<4x8xf32>
    %c8_106 = arith.constant 8 : index
    %c16_107 = arith.constant 16 : index
    %95 = vector.load %arg6[%c8_106, %c16_107] : memref<16x32xf32, #tpu.memory_space<vmem>>, vector<4x8xf32>
    tpu.vector_store %arg6[%c8_106, %c16_107], %94 {strides = array<i32>} : memref<16x32xf32, #tpu.memory_space<vmem>>, vector<4x8xf32>,
    %c12_108 = arith.constant 12 : index
    %c0_109 = arith.constant 0 : index
    %96 = vector.load %arg8[%c12_108, %c0_109] : memref<16x8xf32, #tpu.memory_space<vmem>>, vector<4x8xf32>
    %c8_110 = arith.constant 8 : index
    %c24_111 = arith.constant 24 : index
    %97 = vector.load %arg6[%c8_110, %c24_111] : memref<16x32xf32, #tpu.memory_space<vmem>>, vector<4x8xf32>
    tpu.vector_store %arg6[%c8_110, %c24_111], %96 {strides = array<i32>} : memref<16x32xf32, #tpu.memory_space<vmem>>, vector<4x8xf32>,
    %c0_112 = arith.constant 0 : index
    %c3 = arith.constant 3 : index
    %c0_113 = arith.constant 0 : index
    %c0_114 = arith.constant 0 : index
    %98 = vector.load %arg1[%c0_112, %c3, %c0_113, %c0_114] : memref<1x4x16x8xf32, #tpu.memory_space<vmem>>, vector<1x1x16x8xf32>
    %99 = vector.shape_cast %98 : vector<1x1x16x8xf32> to vector<16x8xf32>
    %c0_115 = arith.constant 0 : index
    %c3_116 = arith.constant 3 : index
    %c0_117 = arith.constant 0 : index
    %c0_118 = arith.constant 0 : index
    %100 = vector.load %arg2[%c0_115, %c3_116, %c0_117, %c0_118] : memref<1x4x8x16xf32, #tpu.memory_space<vmem>>, vector<1x1x8x16xf32>
    %101 = vector.shape_cast %100 : vector<1x1x8x16xf32> to vector<8x16xf32>
    %c0_119 = arith.constant 0 : index
    %c3_120 = arith.constant 3 : index
    %c0_121 = arith.constant 0 : index
    %c0_122 = arith.constant 0 : index
    %102 = vector.load %arg3[%c0_119, %c3_120, %c0_121, %c0_122] : memref<1x4x16x8xf32, #tpu.memory_space<vmem>>, vector<1x1x16x8xf32>
    %103 = vector.shape_cast %102 : vector<1x1x16x8xf32> to vector<16x8xf32>
    %c0_123 = arith.constant 0 : index
    %c48 = arith.constant 48 : index
    %104 = vector.load %arg7[%c0_123, %c48] : memref<16x64xf32, #tpu.memory_space<vmem>>, vector<16x16xf32>
    %cst_124 = arith.constant dense<0.000000e+00> : vector<16x16xf32>
    %105 = tpu.matmul %99, %101, %cst_124 {dimension_numbers = #tpu.dot_dimension_numbers<[1], [0], [0], [1], [0, 0, 1, 1], [], []>} : vector<16x8xf32>, vector<8x16xf32>, vector<16x16xf32> -> vector<16x16xf32>
    %cst_125 = arith.constant 0.353553385 : f32
    %106 = vector.broadcast %cst_125 : f32 to vector<16x16xf32>
    %107 = arith.mulf %106, %105 : vector<16x16xf32>
    %cst_126 = arith.constant dense<0.000000e+00> : vector<16x16xf32>
    %108 = tpu.matmul %107, %104, %cst_126 {dimension_numbers = #tpu.dot_dimension_numbers<[1], [1], [0], [0], [0, 0, 1, 0], [], []>} : vector<16x16xf32>, vector<16x16xf32>, vector<16x16xf32> -> vector<16x16xf32>
    %cst_127 = arith.constant dense<0xFF800000> : vector<16xf32>
    %109 = vector.multi_reduction <maximumf>, %108, %cst_127 [1] : vector<16x16xf32> to vector<16xf32>
    %110 = vector.shape_cast %109 : vector<16xf32> to vector<16x1xf32>
    %111 = vector.broadcast %110 : vector<16x1xf32> to vector<16x16xf32>
    %112 = arith.subf %108, %111 : vector<16x16xf32>
    %113 = math.exp %112 : vector<16x16xf32>
    %cst_128 = arith.constant dense<0.000000e+00> : vector<16xf32>
    %114 = vector.multi_reduction <add>, %113, %cst_128 [1] : vector<16x16xf32> to vector<16xf32>
    %115 = vector.shape_cast %114 : vector<16xf32> to vector<16x1xf32>
    %116 = tpu.reciprocal %115 {approx = true} : vector<16x1xf32> -> vector<16x1xf32>
    %117 = vector.broadcast %116 : vector<16x1xf32> to vector<16x16xf32>
    %118 = arith.mulf %113, %117 : vector<16x16xf32>
    %cst_129 = arith.constant dense<0.000000e+00> : vector<16x8xf32>
    %119 = tpu.matmul %118, %103, %cst_129 {dimension_numbers = #tpu.dot_dimension_numbers<[1], [0], [0], [1], [0, 0, 1, 1], [], []>} : vector<16x16xf32>, vector<16x8xf32>, vector<16x8xf32> -> vector<16x8xf32>
    %c0_130 = arith.constant 0 : index
    %c0_131 = arith.constant 0 : index
    %120 = vector.load %arg8[%c0_130, %c0_131] : memref<16x8xf32, #tpu.memory_space<vmem>>, vector<16x8xf32>
    tpu.vector_store %arg8[%c0_130, %c0_131], %119 {strides = array<i32>} : memref<16x8xf32, #tpu.memory_space<vmem>>, vector<16x8xf32>,
    %c0_132 = arith.constant 0 : index
    %c0_133 = arith.constant 0 : index
    %121 = vector.load %arg8[%c0_132, %c0_133] : memref<16x8xf32, #tpu.memory_space<vmem>>, vector<4x8xf32>
    %c12_134 = arith.constant 12 : index
    %c0_135 = arith.constant 0 : index
    %122 = vector.load %arg6[%c12_134, %c0_135] : memref<16x32xf32, #tpu.memory_space<vmem>>, vector<4x8xf32>
    tpu.vector_store %arg6[%c12_134, %c0_135], %121 {strides = array<i32>} : memref<16x32xf32, #tpu.memory_space<vmem>>, vector<4x8xf32>,
    %c4_136 = arith.constant 4 : index
    %c0_137 = arith.constant 0 : index
    %123 = vector.load %arg8[%c4_136, %c0_137] : memref<16x8xf32, #tpu.memory_space<vmem>>, vector<4x8xf32>
    %c12_138 = arith.constant 12 : index
    %c8_139 = arith.constant 8 : index
    %124 = vector.load %arg6[%c12_138, %c8_139] : memref<16x32xf32, #tpu.memory_space<vmem>>, vector<4x8xf32>
    tpu.vector_store %arg6[%c12_138, %c8_139], %123 {strides = array<i32>} : memref<16x32xf32, #tpu.memory_space<vmem>>, vector<4x8xf32>,
    %c8_140 = arith.constant 8 : index
    %c0_141 = arith.constant 0 : index
    %125 = vector.load %arg8[%c8_140, %c0_141] : memref<16x8xf32, #tpu.memory_space<vmem>>, vector<4x8xf32>
    %c12_142 = arith.constant 12 : index
    %c16_143 = arith.constant 16 : index
    %126 = vector.load %arg6[%c12_142, %c16_143] : memref<16x32xf32, #tpu.memory_space<vmem>>, vector<4x8xf32>
    tpu.vector_store %arg6[%c12_142, %c16_143], %125 {strides = array<i32>} : memref<16x32xf32, #tpu.memory_space<vmem>>, vector<4x8xf32>,
    %c12_144 = arith.constant 12 : index
    %c0_145 = arith.constant 0 : index
    %127 = vector.load %arg8[%c12_144, %c0_145] : memref<16x8xf32, #tpu.memory_space<vmem>>, vector<4x8xf32>
    %c12_146 = arith.constant 12 : index
    %c24_147 = arith.constant 24 : index
    %128 = vector.load %arg6[%c12_146, %c24_147] : memref<16x32xf32, #tpu.memory_space<vmem>>, vector<4x8xf32>
    tpu.vector_store %arg6[%c12_146, %c24_147], %127 {strides = array<i32>} : memref<16x32xf32, #tpu.memory_space<vmem>>, vector<4x8xf32>,
    return
  }
  func.func @transform_0(%arg0: i32) -> (i32, i32, i32, i32) {
    %c0_i32 = arith.constant 0 : i32
    %c0_i32_0 = arith.constant 0 : i32
    %c0_i32_1 = arith.constant 0 : i32
    %c0_i32_2 = arith.constant 0 : i32
    return %arg0, %c0_i32, %c0_i32_0, %c0_i32_1 : i32, i32, i32, i32
  }
  func.func @transform_1(%arg0: i32) -> (i32, i32, i32, i32) {
    %c0_i32 = arith.constant 0 : i32
    %c0_i32_0 = arith.constant 0 : i32
    %c0_i32_1 = arith.constant 0 : i32
    %c0_i32_2 = arith.constant 0 : i32
    return %arg0, %c0_i32, %c0_i32_0, %c0_i32_1 : i32, i32, i32, i32
  }
  func.func @transform_2(%arg0: i32) -> (i32, i32, i32, i32) {
    %c0_i32 = arith.constant 0 : i32
    %c0_i32_0 = arith.constant 0 : i32
    %c0_i32_1 = arith.constant 0 : i32
    %c0_i32_2 = arith.constant 0 : i32
    return %arg0, %c0_i32, %c0_i32_0, %c0_i32_1 : i32, i32, i32, i32
  }
  func.func @transform_3(%arg0: i32) -> (i32, i32, i32) {
    %c0_i32 = arith.constant 0 : i32
    %c0_i32_0 = arith.constant 0 : i32
    %c0_i32_1 = arith.constant 0 : i32
    return %arg0, %c0_i32, %c0_i32_0 : i32, i32, i32
  }
  func.func @transform_4(%arg0: i32) -> (i32, i32) {
    %c0_i32 = arith.constant 0 : i32
    %c0_i32_0 = arith.constant 0 : i32
    %c0_i32_1 = arith.constant 0 : i32
    return %c0_i32, %c0_i32_0 : i32, i32
  }
  func.func @transform_5(%arg0: i32) -> (i32, i32) {
    %c0_i32 = arith.constant 0 : i32
    %c0_i32_0 = arith.constant 0 : i32
    return %arg0, %c0_i32 : i32, i32
  }
}

module attributes {stable_mosaic.version = 11 : i64} {
  func.func @_post_kernel(%arg0: memref<32x32xf32, #tpu.memory_space<vmem>>, %arg1: memref<32x32xf32, #tpu.memory_space<vmem>>, %arg2: memref<32x32xf32, #tpu.memory_space<vmem>>, %arg3: memref<6x32xf32, #tpu.memory_space<vmem>>, %arg4: memref<32x512xf32, #tpu.memory_space<vmem>>, %arg5: memref<1x512xf32, #tpu.memory_space<vmem>>, %arg6: memref<512x32xf32, #tpu.memory_space<vmem>>, %arg7: memref<32x32xf32, #tpu.memory_space<vmem>>) attributes {dimension_semantics = [], scalar_prefetch = 0 : i64, scratch_operands = 0 : i64, tpu.core_type = #tpu.core_type<tc>} {
    %c0 = arith.constant 0 : index
    %c0_0 = arith.constant 0 : index
    %0 = vector.load %arg3[%c0, %c0_0] : memref<6x32xf32, #tpu.memory_space<vmem>>, vector<1x32xf32>
    %c1 = arith.constant 1 : index
    %c0_1 = arith.constant 0 : index
    %1 = vector.load %arg3[%c1, %c0_1] : memref<6x32xf32, #tpu.memory_space<vmem>>, vector<1x32xf32>
    %c2 = arith.constant 2 : index
    %c0_2 = arith.constant 0 : index
    %2 = vector.load %arg3[%c2, %c0_2] : memref<6x32xf32, #tpu.memory_space<vmem>>, vector<1x32xf32>
    %c3 = arith.constant 3 : index
    %c0_3 = arith.constant 0 : index
    %3 = vector.load %arg3[%c3, %c0_3] : memref<6x32xf32, #tpu.memory_space<vmem>>, vector<1x32xf32>
    %c4 = arith.constant 4 : index
    %c0_4 = arith.constant 0 : index
    %4 = vector.load %arg3[%c4, %c0_4] : memref<6x32xf32, #tpu.memory_space<vmem>>, vector<1x32xf32>
    %c5 = arith.constant 5 : index
    %c0_5 = arith.constant 0 : index
    %5 = vector.load %arg3[%c5, %c0_5] : memref<6x32xf32, #tpu.memory_space<vmem>>, vector<1x32xf32>
    %c0_6 = arith.constant 0 : index
    %c0_7 = arith.constant 0 : index
    %6 = vector.load %arg0[%c0_6, %c0_7] : memref<32x32xf32, #tpu.memory_space<vmem>>, vector<32x32xf32>
    %c0_8 = arith.constant 0 : index
    %c0_9 = arith.constant 0 : index
    %7 = vector.load %arg2[%c0_8, %c0_9] : memref<32x32xf32, #tpu.memory_space<vmem>>, vector<32x32xf32>
    %cst = arith.constant dense<0.000000e+00> : vector<32x32xf32>
    %8 = tpu.matmul %6, %7, %cst {dimension_numbers = #tpu.dot_dimension_numbers<[1], [0], [0], [1], [0, 0, 1, 1], [], []>} : vector<32x32xf32>, vector<32x32xf32>, vector<32x32xf32> -> vector<32x32xf32>
    %9 = vector.broadcast %0 : vector<1x32xf32> to vector<32x32xf32>
    %10 = arith.addf %8, %9 : vector<32x32xf32>
    %c0_10 = arith.constant 0 : index
    %c0_11 = arith.constant 0 : index
    %11 = vector.load %arg1[%c0_10, %c0_11] : memref<32x32xf32, #tpu.memory_space<vmem>>, vector<32x32xf32>
    %12 = arith.addf %11, %10 : vector<32x32xf32>
    %cst_12 = arith.constant dense<0.000000e+00> : vector<32xf32>
    %13 = vector.multi_reduction <add>, %12, %cst_12 [0] : vector<32x32xf32> to vector<32xf32>
    %14 = vector.shape_cast %13 : vector<32xf32> to vector<1x32xf32>
    %cst_13 = arith.constant 3.200000e+01 : f32
    %15 = vector.broadcast %cst_13 : f32 to vector<1x32xf32>
    %16 = arith.divf %14, %15 : vector<1x32xf32>
    %17 = vector.broadcast %16 : vector<1x32xf32> to vector<32x32xf32>
    %18 = arith.subf %12, %17 : vector<32x32xf32>
    %19 = arith.mulf %18, %18 : vector<32x32xf32>
    %cst_14 = arith.constant dense<0.000000e+00> : vector<32xf32>
    %20 = vector.multi_reduction <add>, %19, %cst_14 [0] : vector<32x32xf32> to vector<32xf32>
    %21 = vector.shape_cast %20 : vector<32xf32> to vector<1x32xf32>
    %cst_15 = arith.constant 3.200000e+01 : f32
    %22 = vector.broadcast %cst_15 : f32 to vector<1x32xf32>
    %23 = arith.divf %21, %22 : vector<1x32xf32>
    %24 = vector.broadcast %16 : vector<1x32xf32> to vector<32x32xf32>
    %25 = arith.subf %12, %24 : vector<32x32xf32>
    %cst_16 = arith.constant 9.99999974E-6 : f32
    %26 = vector.broadcast %cst_16 : f32 to vector<1x32xf32>
    %27 = arith.addf %23, %26 : vector<1x32xf32>
    %28 = math.rsqrt %27 : vector<1x32xf32>
    %29 = vector.broadcast %28 : vector<1x32xf32> to vector<32x32xf32>
    %30 = arith.mulf %25, %29 : vector<32x32xf32>
    %31 = vector.broadcast %1 : vector<1x32xf32> to vector<32x32xf32>
    %32 = arith.mulf %30, %31 : vector<32x32xf32>
    %33 = vector.broadcast %2 : vector<1x32xf32> to vector<32x32xf32>
    %34 = arith.addf %32, %33 : vector<32x32xf32>
    %c0_17 = arith.constant 0 : index
    %c0_18 = arith.constant 0 : index
    %35 = vector.load %arg4[%c0_17, %c0_18] : memref<32x512xf32, #tpu.memory_space<vmem>>, vector<32x512xf32>
    %cst_19 = arith.constant dense<0.000000e+00> : vector<32x512xf32>
    %36 = tpu.matmul %34, %35, %cst_19 {dimension_numbers = #tpu.dot_dimension_numbers<[1], [0], [0], [1], [0, 0, 1, 1], [], []>} : vector<32x32xf32>, vector<32x512xf32>, vector<32x512xf32> -> vector<32x512xf32>
    %c0_20 = arith.constant 0 : index
    %c0_21 = arith.constant 0 : index
    %37 = vector.load %arg5[%c0_20, %c0_21] : memref<1x512xf32, #tpu.memory_space<vmem>>, vector<1x512xf32>
    %38 = vector.broadcast %37 : vector<1x512xf32> to vector<32x512xf32>
    %39 = arith.addf %36, %38 : vector<32x512xf32>
    %cst_22 = arith.constant 0.000000e+00 : f32
    %40 = vector.broadcast %cst_22 : f32 to vector<32x512xf32>
    %41 = arith.maximumf %39, %40 : vector<32x512xf32>
    %c0_23 = arith.constant 0 : index
    %c0_24 = arith.constant 0 : index
    %42 = vector.load %arg6[%c0_23, %c0_24] : memref<512x32xf32, #tpu.memory_space<vmem>>, vector<512x32xf32>
    %cst_25 = arith.constant dense<0.000000e+00> : vector<32x32xf32>
    %43 = tpu.matmul %41, %42, %cst_25 {dimension_numbers = #tpu.dot_dimension_numbers<[1], [0], [0], [1], [0, 0, 1, 1], [], []>} : vector<32x512xf32>, vector<512x32xf32>, vector<32x32xf32> -> vector<32x32xf32>
    %44 = vector.broadcast %3 : vector<1x32xf32> to vector<32x32xf32>
    %45 = arith.addf %43, %44 : vector<32x32xf32>
    %46 = arith.addf %34, %45 : vector<32x32xf32>
    %cst_26 = arith.constant dense<0.000000e+00> : vector<32xf32>
    %47 = vector.multi_reduction <add>, %46, %cst_26 [0] : vector<32x32xf32> to vector<32xf32>
    %48 = vector.shape_cast %47 : vector<32xf32> to vector<1x32xf32>
    %cst_27 = arith.constant 3.200000e+01 : f32
    %49 = vector.broadcast %cst_27 : f32 to vector<1x32xf32>
    %50 = arith.divf %48, %49 : vector<1x32xf32>
    %51 = vector.broadcast %50 : vector<1x32xf32> to vector<32x32xf32>
    %52 = arith.subf %46, %51 : vector<32x32xf32>
    %53 = arith.mulf %52, %52 : vector<32x32xf32>
    %cst_28 = arith.constant dense<0.000000e+00> : vector<32xf32>
    %54 = vector.multi_reduction <add>, %53, %cst_28 [0] : vector<32x32xf32> to vector<32xf32>
    %55 = vector.shape_cast %54 : vector<32xf32> to vector<1x32xf32>
    %cst_29 = arith.constant 3.200000e+01 : f32
    %56 = vector.broadcast %cst_29 : f32 to vector<1x32xf32>
    %57 = arith.divf %55, %56 : vector<1x32xf32>
    %58 = vector.broadcast %50 : vector<1x32xf32> to vector<32x32xf32>
    %59 = arith.subf %46, %58 : vector<32x32xf32>
    %cst_30 = arith.constant 9.99999974E-6 : f32
    %60 = vector.broadcast %cst_30 : f32 to vector<1x32xf32>
    %61 = arith.addf %57, %60 : vector<1x32xf32>
    %62 = math.rsqrt %61 : vector<1x32xf32>
    %63 = vector.broadcast %62 : vector<1x32xf32> to vector<32x32xf32>
    %64 = arith.mulf %59, %63 : vector<32x32xf32>
    %65 = vector.broadcast %4 : vector<1x32xf32> to vector<32x32xf32>
    %66 = arith.mulf %64, %65 : vector<32x32xf32>
    %67 = vector.broadcast %5 : vector<1x32xf32> to vector<32x32xf32>
    %68 = arith.addf %66, %67 : vector<32x32xf32>
    %c0_31 = arith.constant 0 : index
    %c0_32 = arith.constant 0 : index
    %69 = vector.load %arg7[%c0_31, %c0_32] : memref<32x32xf32, #tpu.memory_space<vmem>>, vector<32x32xf32>
    tpu.vector_store %arg7[%c0_31, %c0_32], %68 {strides = array<i32>} : memref<32x32xf32, #tpu.memory_space<vmem>>, vector<32x32xf32>,
    return
  }
}

</mosaic_0001>

<llo_original>
// kernel: multi_head_attention_layer.3
$region0: #{multi_head_attention_layer.3}
  #allocation0 [shape = 'u32[]', space=smem, size = 0x4, offset = 0x4, fixed_abs, tag = 'smem constant byte address 0x4 - core index']
  #allocation1 [shape = 'u32[144,128]{1,0:T(1,128)}', space=vmem, size = 0x12000, scoped, tag = 'internal scratch']
  %s0 = inlined_call_operand.vmem [shape: f32[32,32], index: 0, kind: input, shape index: {}]
  %s1 = inlined_call_operand.vmem [shape: f32[32,32], index: 1, kind: input, shape index: {}]
  %s2 = inlined_call_operand.vmem [shape: f32[32,32], index: 2, kind: input, shape index: {}]
  %s3 = inlined_call_operand.vmem [shape: f32[6,32], index: 3, kind: input, shape index: {}]
  %s4 = inlined_call_operand.vmem [shape: f32[32,512], index: 4, kind: input, shape index: {}]
  %s5 = inlined_call_operand.vmem [shape: f32[1,512], index: 5, kind: input, shape index: {}]
  %s6 = inlined_call_operand.vmem [shape: f32[512,32], index: 6, kind: input, shape index: {}]
  %s7 = inlined_call_operand.hbm [shape: f32[32,32], index: 7, kind: output, shape index: {}]
  %s8 = sld [smem:[#allocation0]]
  $region38: #{multi_head_attention_layer.3} parent=0
    _
  %s10 = ssub.s32 1, %s8
  %s11 = scalar_select 0, %s10, %s8
  $region1: #{multi_head_attention_layer.3} parent=0
    #allocation2 [shape = 'u8[16384]{0}', space=vmem, size = 0x4000, scoped, tag = 'output window, operand 0, single buffered']
    #allocation3 [shape = 's32[1]{0}', space=sflag, size = 0x4, scoped, tag = 'scoped memory for multi_head_attention_layer.3']
    %12 = vsyncpa [#allocation3], 0
    // Predicated region
    $region2: #{multi_head_attention_layer.3} parent=1 // pred_check
      _
    $region3: #{multi_head_attention_layer.3} parent=1 // pred_check_branch
      %14 = sbr.rel (0) target = $region5
    $region4: #{multi_head_attention_layer.3} parent=1 // pred_region
      _
    $region5: #{multi_head_attention_layer.3} parent=1 // pred_fallthru
      _
    // Predicated region
    $region6: #{multi_head_attention_layer.3} parent=1 // pred_check
      _
    $region7: #{multi_head_attention_layer.3} parent=1 // pred_check_branch
      %16 = sbr.rel (0) target = $region9
    $region8: #{multi_head_attention_layer.3} parent=1 // pred_region
      _
    $region9: #{multi_head_attention_layer.3} parent=1 // pred_fallthru
      _
    // Predicated region
    $region10: #{multi_head_attention_layer.3} parent=1 // pred_check
      _
    $region11: #{multi_head_attention_layer.3} parent=1 // pred_check_branch
      %18 = sbr.rel (0) target = $region13
    $region12: #{multi_head_attention_layer.3} parent=1 // pred_region
      _
    $region13: #{multi_head_attention_layer.3} parent=1 // pred_fallthru
      _
    // Predicated region
    $region14: #{multi_head_attention_layer.3} parent=1 // pred_check
      _
    $region15: #{multi_head_attention_layer.3} parent=1 // pred_check_branch
      %20 = sbr.rel (0) target = $region17
    $region16: #{multi_head_attention_layer.3} parent=1 // pred_region
      _
    $region17: #{multi_head_attention_layer.3} parent=1 // pred_fallthru
      _
    // Predicated region
    $region18: #{multi_head_attention_layer.3} parent=1 // pred_check
      _
    $region19: #{multi_head_attention_layer.3} parent=1 // pred_check_branch
      %22 = sbr.rel (0) target = $region21
    $region20: #{multi_head_attention_layer.3} parent=1 // pred_region
      _
    $region21: #{multi_head_attention_layer.3} parent=1 // pred_fallthru
      _
    // Predicated region
    $region22: #{multi_head_attention_layer.3} parent=1 // pred_check
      _
    $region23: #{multi_head_attention_layer.3} parent=1 // pred_check_branch
      %24 = sbr.rel (0) target = $region25
    $region24: #{multi_head_attention_layer.3} parent=1 // pred_region
      _
    $region25: #{multi_head_attention_layer.3} parent=1 // pred_fallthru
      _
    // Predicated region
    $region26: #{multi_head_attention_layer.3} parent=1 // pred_check
      _
    $region27: #{multi_head_attention_layer.3} parent=1 // pred_check_branch
      %26 = sbr.rel (0) target = $region29
    $region28: #{multi_head_attention_layer.3} parent=1 // pred_region
      _
    $region29: #{multi_head_attention_layer.3} parent=1 // pred_fallthru
      _
    %v27 = vld [vmem:[%s3] sm:$0x1]
    %v28 = vld [vmem:[%s3 + $0x1] sm:$0x1]
    %v29 = vld [vmem:[%s3 + $0x2] sm:$0x1]
    %v30 = vld [vmem:[%s3 + $0x3] sm:$0x1]
    %v31 = vld [vmem:[%s3 + $0x4] sm:$0x1]
    %v32 = vld [vmem:[%s3 + $0x5] sm:$0x1]
    %v33 = vld [vmem:[%s0] sm:$0xff]
    %v34 = vld [vmem:[%s0 + $0x8] sm:$0xff]
    %v35 = vld [vmem:[%s0 + $0x10] sm:$0xff]
    %v36 = vld [vmem:[%s0 + $0x18] sm:$0xff]
    %v37 = vld [vmem:[%s2] sm:$0xff]
    %v38 = vld [vmem:[%s2 + $0x8] sm:$0xff]
    %v39 = vld [vmem:[%s2 + $0x10] sm:$0xff]
    %v40 = vld [vmem:[%s2 + $0x18] sm:$0xff]
    %v41 = vlaneseq
    %v42 = vshrl.u32 %v41, 7
    %v43 = vsub.s32 0, %v42
    %v44 = vrot.slane %v27, %v43
    %vm45 = vcmask 261120
    %v47 = vsel %vm45, %v33, 0
    %v50 = vsel %vm45, %v34, 0
    %v53 = vsel %vm45, %v35, 0
    %v56 = vsel %vm45, %v36, 0
    %58 = vmatprep.subr.mxu0 0.0
    %59 = vmatpush1.msra.mxu0 0.0
    %60 = vmatprep.subr.mxu0 0.0
    %61 = vmatpush1.msra.mxu0 0.0
    %62 = vmatprep.subr.mxu0 0.0
    %63 = vmatpush1.msra.mxu0 0.0
    %64 = vmatprep.subr.mxu0 0.0
    %65 = vmatpush1.msra.mxu0 0.0
    %66 = vmatprep.subr.mxu0 0.0
    %67 = vmatpush1.msra.mxu0 0.0
    %68 = vmatprep.subr.mxu0 0.0
    %69 = vmatpush1.msra.mxu0 0.0
    %70 = vmatprep.subr.mxu0 0.0
    %71 = vmatpush1.msra.mxu0 0.0
    %72 = vmatprep.subr.mxu0 0.0
    %73 = vmatpush1.msra.mxu0 0.0
    %74 = vmatprep.subr.mxu0 0.0
    %75 = vmatpush1.msra.mxu0 0.0
    %76 = vmatprep.subr.mxu0 0.0
    %77 = vmatpush1.msra.mxu0 0.0
    %78 = vmatprep.subr.mxu0 0.0
    %79 = vmatpush1.msra.mxu0 0.0
    %80 = vmatprep.subr.mxu0 0.0
    %81 = vmatpush1.msra.mxu0 0.0
    %82 = vmatprep.subr.mxu0 0.0
    %83 = vmatpush1.msra.mxu0 %v40
    %84 = vmatprep.subr.mxu0 0.0
    %85 = vmatpush1.msra.mxu0 %v39
    %86 = vmatprep.subr.mxu0 0.0
    %87 = vmatpush1.msra.mxu0 %v38
    %88 = vmatprep.subr.mxu0 0.0
    %89 = vmatpush1.msra.mxu0 %v37
    %90 = vmatprep.subr.mxu0 0.0
    %91 = vmatpush2.msra.mxu0 0.0
    %92 = vmatprep.subr.mxu0 0.0
    %93 = vmatpush2.msra.mxu0 0.0
    %94 = vmatprep.subr.mxu0 0.0
    %95 = vmatpush2.msra.mxu0 0.0
    %96 = vmatprep.subr.mxu0 0.0
    %97 = vmatpush2.msra.mxu0 0.0
    %98 = vmatprep.subr.mxu0 0.0
    %99 = vmatpush2.msra.mxu0 0.0
    %100 = vmatprep.subr.mxu0 0.0
    %101 = vmatpush2.msra.mxu0 0.0
    %102 = vmatprep.subr.mxu0 0.0
    %103 = vmatpush2.msra.mxu0 0.0
    %104 = vmatprep.subr.mxu0 0.0
    %105 = vmatpush2.msra.mxu0 0.0
    %106 = vmatprep.subr.mxu0 0.0
    %107 = vmatpush2.msra.mxu0 0.0
    %108 = vmatprep.subr.mxu0 0.0
    %109 = vmatpush2.msra.mxu0 0.0
    %110 = vmatprep.subr.mxu0 0.0
    %111 = vmatpush2.msra.mxu0 0.0
    %112 = vmatprep.subr.mxu0 0.0
    %113 = vmatpush2.msra.mxu0 0.0
    %114 = vmatprep.subr.mxu0 0.0
    %115 = vmatpush2.msra.mxu0 0.0
    %116 = vmatprep.subr.mxu0 0.0
    %117 = vmatpush2.msra.mxu0 0.0
    %118 = vmatprep.subr.mxu0 0.0
    %119 = vmatpush2.msra.mxu0 0.0
    %120 = vmatprep.subr.mxu0 0.0
    %121 = vmatpush2.msra.mxu0 0.0
    %122 = vmatprep.mubr.f32.mxu0 0.0
    %123 = vmatmul.mubr.f32.gmra.mxu0 %v47
    %v124 = vpop.f32.mrf.mxu0
    %v125 = vadd.f32 %v44, %v124
    %v126 = vpop.f32.mrf.mxu0
    %127 = vmatprep.mubr.f32.mxu0 0.0
    %128 = vmatmul.mubr.f32.gmra.mxu0 %v50
    %v129 = vpop.f32.mrf.mxu0
    %v130 = vadd.f32 %v44, %v129
    %v131 = vpop.f32.mrf.mxu0
    %132 = vmatprep.mubr.f32.mxu0 0.0
    %133 = vmatmul.mubr.f32.gmra.mxu0 %v53
    %v134 = vpop.f32.mrf.mxu0
    %v135 = vadd.f32 %v44, %v134
    %v136 = vpop.f32.mrf.mxu0
    %137 = vmatprep.mubr.f32.mxu0 0.0
    %138 = vmatmul.mubr.f32.gmra.mxu0 %v56
    %v139 = vpop.f32.mrf.mxu0
    %v140 = vadd.f32 %v44, %v139
    %v141 = vpop.f32.mrf.mxu0
    %142 = vdwg.mxu0
    %v143 = vld [vmem:[%s1] sm:$0xff]
    %v144 = vld [vmem:[%s1 + $0x8] sm:$0xff]
    %v145 = vld [vmem:[%s1 + $0x10] sm:$0xff]
    %v146 = vld [vmem:[%s1 + $0x18] sm:$0xff]
    %v147 = vadd.f32 %v143, %v125
    %v148 = vadd.f32 %v144, %v130
    %v149 = vadd.f32 %v145, %v135
    %v150 = vadd.f32 %v146, %v140
    %v151 = vsel %vm45, %v147, 0.0
    %v152 = vsel %vm45, %v148, 0.0
    %v153 = vadd.f32 %v151, %v152
    %v154 = vsel %vm45, %v149, 0.0
    %v155 = vadd.f32 %v153, %v154
    %v156 = vsel %vm45, %v150, 0.0
    %v157 = vadd.f32 %v155, %v156
    %v158 = vrot.slane %v157, 4
    %v159 = vadd.f32 %v157, %v158
    %v160 = vrot.slane %v159, 2
    %v161 = vadd.f32 %v159, %v160
    %v162 = vrot.slane %v161, 1
    %v163 = vadd.f32 %v161, %v162
    %v164 = vrcp.pop 32.0
    %v165 = vmul.f32 %v163, %v164
    %v166 = vsub.f32 %v147, %v165
    %v167 = vsub.f32 %v148, %v165
    %v168 = vsub.f32 %v149, %v165
    %v169 = vsub.f32 %v150, %v165
    %v170 = vmul.f32 %v166, %v166
    %v171 = vmul.f32 %v167, %v167
    %v172 = vmul.f32 %v168, %v168
    %v173 = vmul.f32 %v169, %v169
    %v174 = vsel %vm45, %v170, 0.0
    %v175 = vsel %vm45, %v171, 0.0
    %v176 = vadd.f32 %v174, %v175
    %v177 = vsel %vm45, %v172, 0.0
    %v178 = vadd.f32 %v176, %v177
    %v179 = vsel %vm45, %v173, 0.0
    %v180 = vadd.f32 %v178, %v179
    %v181 = vrot.slane %v180, 4
    %v182 = vadd.f32 %v180, %v181
    %v183 = vrot.slane %v182, 2
    %v184 = vadd.f32 %v182, %v183
    %v185 = vrot.slane %v184, 1
    %v186 = vadd.f32 %v184, %v185
    %v187 = vmul.f32 %v186, %v164
    %v188 = vadd.f32 %v187, 1e-05
    %v189 = vrsqrt.pop %v188
    %v190 = vmul.f32 %v166, %v189
    %v191 = vmul.f32 %v167, %v189
    %v192 = vmul.f32 %v168, %v189
    %v193 = vmul.f32 %v169, %v189
    %v194 = vlaneseq
    %v195 = vshrl.u32 %v194, 7
    %v196 = vsub.s32 0, %v195
    %v197 = vrot.slane %v28, %v196
    %v198 = vmul.f32 %v190, %v197
    %v199 = vmul.f32 %v191, %v197
    %v200 = vmul.f32 %v192, %v197
    %v201 = vmul.f32 %v193, %v197
    %v202 = vlaneseq
    %v203 = vshrl.u32 %v202, 7
    %v204 = vsub.s32 0, %v203
    %v205 = vrot.slane %v29, %v204
    %v206 = vadd.f32 %v198, %v205
    %v207 = vadd.f32 %v199, %v205
    %v208 = vadd.f32 %v200, %v205
    %v209 = vadd.f32 %v201, %v205
    %v210 = vld [vmem:[%s4] sm:$0xff]
    %v211 = vld [vmem:[%s4 + $0x8] sm:$0xff]
    %v212 = vld [vmem:[%s4 + $0x10] sm:$0xff]
    %v213 = vld [vmem:[%s4 + $0x18] sm:$0xff]
    %v214 = vld [vmem:[%s4 + $0x20] sm:$0xff]
    %v215 = vld [vmem:[%s4 + $0x28] sm:$0xff]
    %v216 = vld [vmem:[%s4 + $0x30] sm:$0xff]
    %v217 = vld [vmem:[%s4 + $0x38] sm:$0xff]
    %v218 = vld [vmem:[%s4 + $0x40] sm:$0xff]
    %v219 = vld [vmem:[%s4 + $0x48] sm:$0xff]
    %v220 = vld [vmem:[%s4 + $0x50] sm:$0xff]
    %v221 = vld [vmem:[%s4 + $0x58] sm:$0xff]
    %v222 = vld [vmem:[%s4 + $0x60] sm:$0xff]
    %v223 = vld [vmem:[%s4 + $0x68] sm:$0xff]
    %v224 = vld [vmem:[%s4 + $0x70] sm:$0xff]
    %v225 = vld [vmem:[%s4 + $0x78] sm:$0xff]
    %v226 = vld [vmem:[%s5] sm:$0xf]
    %v228 = vlaneseq
    %v229 = vshrl.u32 %v228, 7
    %v230 = vsub.s32 0, %v229
    %v231 = vrot.slane %v226, %v230
    %v232 = vlaneseq
    %v233 = vshrl.u32 %v232, 7
    %v234 = vsub.s32 1, %v233
    %v235 = vrot.slane %v226, %v234
    %v236 = vlaneseq
    %v237 = vshrl.u32 %v236, 7
    %v238 = vsub.s32 2, %v237
    %v239 = vrot.slane %v226, %v238
    %v240 = vlaneseq
    %v241 = vshrl.u32 %v240, 7
    %v242 = vsub.s32 3, %v241
    %v243 = vrot.slane %v226, %v242
    %v249 = vsel %vm45, %v206, 0
    %v252 = vsel %vm45, %v207, 0
    %v255 = vsel %vm45, %v208, 0
    %v258 = vsel %vm45, %v209, 0
    %260 = vmatprep.subr.mxu0 0.0
    %261 = vmatpush1.msra.mxu0 0.0
    %262 = vmatprep.subr.mxu0 0.0
    %263 = vmatpush1.msra.mxu0 0.0
    %264 = vmatprep.subr.mxu0 0.0
    %265 = vmatpush1.msra.mxu0 0.0
    %266 = vmatprep.subr.mxu0 0.0
    %267 = vmatpush1.msra.mxu0 0.0
    %268 = vmatprep.subr.mxu0 0.0
    %269 = vmatpush1.msra.mxu0 0.0
    %270 = vmatprep.subr.mxu0 0.0
    %271 = vmatpush1.msra.mxu0 0.0
    %272 = vmatprep.subr.mxu0 0.0
    %273 = vmatpush1.msra.mxu0 0.0
    %274 = vmatprep.subr.mxu0 0.0
    %275 = vmatpush1.msra.mxu0 0.0
    %276 = vmatprep.subr.mxu0 0.0
    %277 = vmatpush1.msra.mxu0 0.0
    %278 = vmatprep.subr.mxu0 0.0
    %279 = vmatpush1.msra.mxu0 0.0
    %280 = vmatprep.subr.mxu0 0.0
    %281 = vmatpush1.msra.mxu0 0.0
    %282 = vmatprep.subr.mxu0 0.0
    %283 = vmatpush1.msra.mxu0 0.0
    %284 = vmatprep.subr.mxu0 %v223
    %285 = vmatpush1.msra.mxu0 %v222
    %286 = vmatprep.subr.mxu0 %v219
    %287 = vmatpush1.msra.mxu0 %v218
    %288 = vmatprep.subr.mxu0 %v215
    %289 = vmatpush1.msra.mxu0 %v214
    %290 = vmatprep.subr.mxu0 %v211
    %291 = vmatpush1.msra.mxu0 %v210
    %292 = vmatprep.subr.mxu0 0.0
    %293 = vmatpush2.msra.mxu0 0.0
    %294 = vmatprep.subr.mxu0 0.0
    %295 = vmatpush2.msra.mxu0 0.0
    %296 = vmatprep.subr.mxu0 0.0
    %297 = vmatpush2.msra.mxu0 0.0
    %298 = vmatprep.subr.mxu0 0.0
    %299 = vmatpush2.msra.mxu0 0.0
    %300 = vmatprep.subr.mxu0 0.0
    %301 = vmatpush2.msra.mxu0 0.0
    %302 = vmatprep.subr.mxu0 0.0
    %303 = vmatpush2.msra.mxu0 0.0
    %304 = vmatprep.subr.mxu0 0.0
    %305 = vmatpush2.msra.mxu0 0.0
    %306 = vmatprep.subr.mxu0 0.0
    %307 = vmatpush2.msra.mxu0 0.0
    %308 = vmatprep.subr.mxu0 0.0
    %309 = vmatpush2.msra.mxu0 0.0
    %310 = vmatprep.subr.mxu0 0.0
    %311 = vmatpush2.msra.mxu0 0.0
    %312 = vmatprep.subr.mxu0 0.0
    %313 = vmatpush2.msra.mxu0 0.0
    %314 = vmatprep.subr.mxu0 0.0
    %315 = vmatpush2.msra.mxu0 0.0
    %316 = vmatprep.subr.mxu0 0.0
    %317 = vmatpush2.msra.mxu0 0.0
    %318 = vmatprep.subr.mxu0 0.0
    %319 = vmatpush2.msra.mxu0 0.0
    %320 = vmatprep.subr.mxu0 0.0
    %321 = vmatpush2.msra.mxu0 0.0
    %322 = vmatprep.subr.mxu0 0.0
    %323 = vmatpush2.msra.mxu0 0.0
    %324 = vmatprep.mubr.f32.mxu0 0.0
    %325 = vmatmul.mubr.f32.gmra.mxu0 %v249
    %v326 = vpop.f32.mrf.mxu0
    %v327 = vadd.f32 %v231, %v326
    %v328 = vpop.f32.mrf.mxu0
    %v329 = vadd.f32 %v235, %v328
    %330 = vmatprep.mubr.f32.mxu0 0.0
    %331 = vmatmul.mubr.f32.gmra.mxu0 %v252
    %v332 = vpop.f32.mrf.mxu0
    %v333 = vadd.f32 %v231, %v332
    %v334 = vpop.f32.mrf.mxu0
    %v335 = vadd.f32 %v235, %v334
    %336 = vmatprep.mubr.f32.mxu0 0.0
    %337 = vmatmul.mubr.f32.gmra.mxu0 %v255
    %v338 = vpop.f32.mrf.mxu0
    %v339 = vadd.f32 %v231, %v338
    %v340 = vpop.f32.mrf.mxu0
    %v341 = vadd.f32 %v235, %v340
    %342 = vmatprep.mubr.f32.mxu0 0.0
    %343 = vmatmul.mubr.f32.gmra.mxu0 %v258
    %v344 = vpop.f32.mrf.mxu0
    %v345 = vadd.f32 %v231, %v344
    %v346 = vpop.f32.mrf.mxu0
    %v347 = vadd.f32 %v235, %v346
    %348 = vdwg.mxu0
    %349 = vmatprep.subr.mxu0 0.0
    %350 = vmatpush1.msra.mxu0 0.0
    %351 = vmatprep.subr.mxu0 0.0
    %352 = vmatpush1.msra.mxu0 0.0
    %353 = vmatprep.subr.mxu0 0.0
    %354 = vmatpush1.msra.mxu0 0.0
    %355 = vmatprep.subr.mxu0 0.0
    %356 = vmatpush1.msra.mxu0 0.0
    %357 = vmatprep.subr.mxu0 0.0
    %358 = vmatpush1.msra.mxu0 0.0
    %359 = vmatprep.subr.mxu0 0.0
    %360 = vmatpush1.msra.mxu0 0.0
    %361 = vmatprep.subr.mxu0 0.0
    %362 = vmatpush1.msra.mxu0 0.0
    %363 = vmatprep.subr.mxu0 0.0
    %364 = vmatpush1.msra.mxu0 0.0
    %365 = vmatprep.subr.mxu0 0.0
    %366 = vmatpush1.msra.mxu0 0.0
    %367 = vmatprep.subr.mxu0 0.0
    %368 = vmatpush1.msra.mxu0 0.0
    %369 = vmatprep.subr.mxu0 0.0
    %370 = vmatpush1.msra.mxu0 0.0
    %371 = vmatprep.subr.mxu0 0.0
    %372 = vmatpush1.msra.mxu0 0.0
    %373 = vmatprep.subr.mxu0 %v225
    %374 = vmatpush1.msra.mxu0 %v224
    %375 = vmatprep.subr.mxu0 %v221
    %376 = vmatpush1.msra.mxu0 %v220
    %377 = vmatprep.subr.mxu0 %v217
    %378 = vmatpush1.msra.mxu0 %v216
    %379 = vmatprep.subr.mxu0 %v213
    %380 = vmatpush1.msra.mxu0 %v212
    %381 = vmatprep.subr.mxu0 0.0
    %382 = vmatpush2.msra.mxu0 0.0
    %383 = vmatprep.subr.mxu0 0.0
    %384 = vmatpush2.msra.mxu0 0.0
    %385 = vmatprep.subr.mxu0 0.0
    %386 = vmatpush2.msra.mxu0 0.0
    %387 = vmatprep.subr.mxu0 0.0
    %388 = vmatpush2.msra.mxu0 0.0
    %389 = vmatprep.subr.mxu0 0.0
    %390 = vmatpush2.msra.mxu0 0.0
    %391 = vmatprep.subr.mxu0 0.0
    %392 = vmatpush2.msra.mxu0 0.0
    %393 = vmatprep.subr.mxu0 0.0
    %394 = vmatpush2.msra.mxu0 0.0
    %395 = vmatprep.subr.mxu0 0.0
    %396 = vmatpush2.msra.mxu0 0.0
    %397 = vmatprep.subr.mxu0 0.0
    %398 = vmatpush2.msra.mxu0 0.0
    %399 = vmatprep.subr.mxu0 0.0
    %400 = vmatpush2.msra.mxu0 0.0
    %401 = vmatprep.subr.mxu0 0.0
    %402 = vmatpush2.msra.mxu0 0.0
    %403 = vmatprep.subr.mxu0 0.0
    %404 = vmatpush2.msra.mxu0 0.0
    %405 = vmatprep.subr.mxu0 0.0
    %406 = vmatpush2.msra.mxu0 0.0
    %407 = vmatprep.subr.mxu0 0.0
    %408 = vmatpush2.msra.mxu0 0.0
    %409 = vmatprep.subr.mxu0 0.0
    %410 = vmatpush2.msra.mxu0 0.0
    %411 = vmatprep.subr.mxu0 0.0
    %412 = vmatpush2.msra.mxu0 0.0
    %413 = vmatprep.mubr.f32.mxu0 0.0
    %414 = vmatmul.mubr.f32.gmra.mxu0 %v249
    %v415 = vpop.f32.mrf.mxu0
    %v416 = vadd.f32 %v239, %v415
    %v417 = vpop.f32.mrf.mxu0
    %v418 = vadd.f32 %v243, %v417
    %419 = vmatprep.mubr.f32.mxu0 0.0
    %420 = vmatmul.mubr.f32.gmra.mxu0 %v252
    %v421 = vpop.f32.mrf.mxu0
    %v422 = vadd.f32 %v239, %v421
    %v423 = vpop.f32.mrf.mxu0
    %v424 = vadd.f32 %v243, %v423
    %425 = vmatprep.mubr.f32.mxu0 0.0
    %426 = vmatmul.mubr.f32.gmra.mxu0 %v255
    %v427 = vpop.f32.mrf.mxu0
    %v428 = vadd.f32 %v239, %v427
    %v429 = vpop.f32.mrf.mxu0
    %v430 = vadd.f32 %v243, %v429
    %431 = vmatprep.mubr.f32.mxu0 0.0
    %432 = vmatmul.mubr.f32.gmra.mxu0 %v258
    %v433 = vpop.f32.mrf.mxu0
    %v434 = vadd.f32 %v239, %v433
    %v435 = vpop.f32.mrf.mxu0
    %v436 = vadd.f32 %v243, %v435
    %437 = vdwg.mxu0
    %v438 = vmax.f32 %v327, 0.0
    %v439 = vmax.f32 %v329, 0.0
    %v440 = vmax.f32 %v416, 0.0
    %v441 = vmax.f32 %v418, 0.0
    %v442 = vmax.f32 %v333, 0.0
    %v443 = vmax.f32 %v335, 0.0
    %v444 = vmax.f32 %v422, 0.0
    %v445 = vmax.f32 %v424, 0.0
    %v446 = vmax.f32 %v339, 0.0
    %v447 = vmax.f32 %v341, 0.0
    %v448 = vmax.f32 %v428, 0.0
    %v449 = vmax.f32 %v430, 0.0
    %v450 = vmax.f32 %v345, 0.0
    %v451 = vmax.f32 %v347, 0.0
    %v452 = vmax.f32 %v434, 0.0
    %v453 = vmax.f32 %v436, 0.0
    %v454 = vld [vmem:[%s6] sm:$0xff]
    %v455 = vld [vmem:[%s6 + $0x8] sm:$0xff]
    %v456 = vld [vmem:[%s6 + $0x10] sm:$0xff]
    %v457 = vld [vmem:[%s6 + $0x18] sm:$0xff]
    %v458 = vld [vmem:[%s6 + $0x20] sm:$0xff]
    %v459 = vld [vmem:[%s6 + $0x28] sm:$0xff]
    %v460 = vld [vmem:[%s6 + $0x30] sm:$0xff]
    %v461 = vld [vmem:[%s6 + $0x38] sm:$0xff]
    %v462 = vld [vmem:[%s6 + $0x40] sm:$0xff]
    %v463 = vld [vmem:[%s6 + $0x48] sm:$0xff]
    %v464 = vld [vmem:[%s6 + $0x50] sm:$0xff]
    %v465 = vld [vmem:[%s6 + $0x58] sm:$0xff]
    %v466 = vld [vmem:[%s6 + $0x60] sm:$0xff]
    %v467 = vld [vmem:[%s6 + $0x68] sm:$0xff]
    %v468 = vld [vmem:[%s6 + $0x70] sm:$0xff]
    %v469 = vld [vmem:[%s6 + $0x78] sm:$0xff]
    %v470 = vld [vmem:[%s6 + $0x80] sm:$0xff]
    %v471 = vld [vmem:[%s6 + $0x88] sm:$0xff]
    %v472 = vld [vmem:[%s6 + $0x90] sm:$0xff]
    %v473 = vld [vmem:[%s6 + $0x98] sm:$0xff]
    %v474 = vld [vmem:[%s6 + $0xa0] sm:$0xff]
    %v475 = vld [vmem:[%s6 + $0xa8] sm:$0xff]
    %v476 = vld [vmem:[%s6 + $0xb0] sm:$0xff]
    %v477 = vld [vmem:[%s6 + $0xb8] sm:$0xff]
    %v478 = vld [vmem:[%s6 + $0xc0] sm:$0xff]
    %v479 = vld [vmem:[%s6 + $0xc8] sm:$0xff]
    %v480 = vld [vmem:[%s6 + $0xd0] sm:$0xff]
    %v481 = vld [vmem:[%s6 + $0xd8] sm:$0xff]
    %v482 = vld [vmem:[%s6 + $0xe0] sm:$0xff]
    %v483 = vld [vmem:[%s6 + $0xe8] sm:$0xff]
    %v484 = vld [vmem:[%s6 + $0xf0] sm:$0xff]
    %v485 = vld [vmem:[%s6 + $0xf8] sm:$0xff]
    %v486 = vld [vmem:[%s6 + $0x100] sm:$0xff]
    %v487 = vld [vmem:[%s6 + $0x108] sm:$0xff]
    %v488 = vld [vmem:[%s6 + $0x110] sm:$0xff]
    %v489 = vld [vmem:[%s6 + $0x118] sm:$0xff]
    %v490 = vld [vmem:[%s6 + $0x120] sm:$0xff]
    %v491 = vld [vmem:[%s6 + $0x128] sm:$0xff]
    %v492 = vld [vmem:[%s6 + $0x130] sm:$0xff]
    %v493 = vld [vmem:[%s6 + $0x138] sm:$0xff]
    %v494 = vld [vmem:[%s6 + $0x140] sm:$0xff]
    %v495 = vld [vmem:[%s6 + $0x148] sm:$0xff]
    %v496 = vld [vmem:[%s6 + $0x150] sm:$0xff]
    %v497 = vld [vmem:[%s6 + $0x158] sm:$0xff]
    %v498 = vld [vmem:[%s6 + $0x160] sm:$0xff]
    %v499 = vld [vmem:[%s6 + $0x168] sm:$0xff]
    %v500 = vld [vmem:[%s6 + $0x170] sm:$0xff]
    %v501 = vld [vmem:[%s6 + $0x178] sm:$0xff]
    %v502 = vld [vmem:[%s6 + $0x180] sm:$0xff]
    %v503 = vld [vmem:[%s6 + $0x188] sm:$0xff]
    %v504 = vld [vmem:[%s6 + $0x190] sm:$0xff]
    %v505 = vld [vmem:[%s6 + $0x198] sm:$0xff]
    %v506 = vld [vmem:[%s6 + $0x1a0] sm:$0xff]
    %v507 = vld [vmem:[%s6 + $0x1a8] sm:$0xff]
    %v508 = vld [vmem:[%s6 + $0x1b0] sm:$0xff]
    %v509 = vld [vmem:[%s6 + $0x1b8] sm:$0xff]
    %v510 = vld [vmem:[%s6 + $0x1c0] sm:$0xff]
    %v511 = vld [vmem:[%s6 + $0x1c8] sm:$0xff]
    %v512 = vld [vmem:[%s6 + $0x1d0] sm:$0xff]
    %v513 = vld [vmem:[%s6 + $0x1d8] sm:$0xff]
    %v514 = vld [vmem:[%s6 + $0x1e0] sm:$0xff]
    %v515 = vld [vmem:[%s6 + $0x1e8] sm:$0xff]
    %v516 = vld [vmem:[%s6 + $0x1f0] sm:$0xff]
    %v517 = vld [vmem:[%s6 + $0x1f8] sm:$0xff]
    %v518 = vlaneseq
    %v519 = vshrl.u32 %v518, 7
    %v520 = vsub.s32 0, %v519
    %v521 = vrot.slane %v30, %v520
    %522 = vmatprep.subr.mxu0 0.0
    %523 = vmatpush1.msra.mxu0 %v469
    %524 = vmatprep.subr.mxu0 0.0
    %525 = vmatpush1.msra.mxu0 %v468
    %526 = vmatprep.subr.mxu0 0.0
    %527 = vmatpush1.msra.mxu0 %v467
    %528 = vmatprep.subr.mxu0 0.0
    %529 = vmatpush1.msra.mxu0 %v466
    %530 = vmatprep.subr.mxu0 0.0
    %531 = vmatpush1.msra.mxu0 %v465
    %532 = vmatprep.subr.mxu0 0.0
    %533 = vmatpush1.msra.mxu0 %v464
    %534 = vmatprep.subr.mxu0 0.0
    %535 = vmatpush1.msra.mxu0 %v463
    %536 = vmatprep.subr.mxu0 0.0
    %537 = vmatpush1.msra.mxu0 %v462
    %538 = vmatprep.subr.mxu0 0.0
    %539 = vmatpush1.msra.mxu0 %v461
    %540 = vmatprep.subr.mxu0 0.0
    %541 = vmatpush1.msra.mxu0 %v460
    %542 = vmatprep.subr.mxu0 0.0
    %543 = vmatpush1.msra.mxu0 %v459
    %544 = vmatprep.subr.mxu0 0.0
    %545 = vmatpush1.msra.mxu0 %v458
    %546 = vmatprep.subr.mxu0 0.0
    %547 = vmatpush1.msra.mxu0 %v457
    %548 = vmatprep.subr.mxu0 0.0
    %549 = vmatpush1.msra.mxu0 %v456
    %550 = vmatprep.subr.mxu0 0.0
    %551 = vmatpush1.msra.mxu0 %v455
    %552 = vmatprep.subr.mxu0 0.0
    %553 = vmatpush1.msra.mxu0 %v454
    %554 = vmatprep.subr.mxu0 0.0
    %555 = vmatpush2.msra.mxu0 %v485
    %556 = vmatprep.subr.mxu0 0.0
    %557 = vmatpush2.msra.mxu0 %v484
    %558 = vmatprep.subr.mxu0 0.0
    %559 = vmatpush2.msra.mxu0 %v483
    %560 = vmatprep.subr.mxu0 0.0
    %561 = vmatpush2.msra.mxu0 %v482
    %562 = vmatprep.subr.mxu0 0.0
    %563 = vmatpush2.msra.mxu0 %v481
    %564 = vmatprep.subr.mxu0 0.0
    %565 = vmatpush2.msra.mxu0 %v480
    %566 = vmatprep.subr.mxu0 0.0
    %567 = vmatpush2.msra.mxu0 %v479
    %568 = vmatprep.subr.mxu0 0.0
    %569 = vmatpush2.msra.mxu0 %v478
    %570 = vmatprep.subr.mxu0 0.0
    %571 = vmatpush2.msra.mxu0 %v477
    %572 = vmatprep.subr.mxu0 0.0
    %573 = vmatpush2.msra.mxu0 %v476
    %574 = vmatprep.subr.mxu0 0.0
    %575 = vmatpush2.msra.mxu0 %v475
    %576 = vmatprep.subr.mxu0 0.0
    %577 = vmatpush2.msra.mxu0 %v474
    %578 = vmatprep.subr.mxu0 0.0
    %579 = vmatpush2.msra.mxu0 %v473
    %580 = vmatprep.subr.mxu0 0.0
    %581 = vmatpush2.msra.mxu0 %v472
    %582 = vmatprep.subr.mxu0 0.0
    %583 = vmatpush2.msra.mxu0 %v471
    %584 = vmatprep.subr.mxu0 0.0
    %585 = vmatpush2.msra.mxu0 %v470
    %586 = vmatprep.mubr.f32.mxu0 %v439
    %587 = vmatmul.mubr.f32.gmra.mxu0 %v438
    %v588 = vpop.f32.mrf.mxu0
    %v589 = vadd.f32 %v521, %v588
    %v590 = vpop.f32.mrf.mxu0
    %591 = vmatprep.mubr.f32.mxu0 %v443
    %592 = vmatmul.mubr.f32.gmra.mxu0 %v442
    %v593 = vpop.f32.mrf.mxu0
    %v594 = vadd.f32 %v521, %v593
    %v595 = vpop.f32.mrf.mxu0
    %596 = vmatprep.mubr.f32.mxu0 %v447
    %597 = vmatmul.mubr.f32.gmra.mxu0 %v446
    %v598 = vpop.f32.mrf.mxu0
    %v599 = vadd.f32 %v521, %v598
    %v600 = vpop.f32.mrf.mxu0
    %601 = vmatprep.mubr.f32.mxu0 %v451
    %602 = vmatmul.mubr.f32.gmra.mxu0 %v450
    %v603 = vpop.f32.mrf.mxu0
    %v604 = vadd.f32 %v521, %v603
    %v605 = vpop.f32.mrf.mxu0
    %606 = vdwg.mxu0
    %607 = vmatprep.subr.mxu0 0.0
    %608 = vmatpush1.msra.mxu0 %v501
    %609 = vmatprep.subr.mxu0 0.0
    %610 = vmatpush1.msra.mxu0 %v500
    %611 = vmatprep.subr.mxu0 0.0
    %612 = vmatpush1.msra.mxu0 %v499
    %613 = vmatprep.subr.mxu0 0.0
    %614 = vmatpush1.msra.mxu0 %v498
    %615 = vmatprep.subr.mxu0 0.0
    %616 = vmatpush1.msra.mxu0 %v497
    %617 = vmatprep.subr.mxu0 0.0
    %618 = vmatpush1.msra.mxu0 %v496
    %619 = vmatprep.subr.mxu0 0.0
    %620 = vmatpush1.msra.mxu0 %v495
    %621 = vmatprep.subr.mxu0 0.0
    %622 = vmatpush1.msra.mxu0 %v494
    %623 = vmatprep.subr.mxu0 0.0
    %624 = vmatpush1.msra.mxu0 %v493
    %625 = vmatprep.subr.mxu0 0.0
    %626 = vmatpush1.msra.mxu0 %v492
    %627 = vmatprep.subr.mxu0 0.0
    %628 = vmatpush1.msra.mxu0 %v491
    %629 = vmatprep.subr.mxu0 0.0
    %630 = vmatpush1.msra.mxu0 %v490
    %631 = vmatprep.subr.mxu0 0.0
    %632 = vmatpush1.msra.mxu0 %v489
    %633 = vmatprep.subr.mxu0 0.0
    %634 = vmatpush1.msra.mxu0 %v488
    %635 = vmatprep.subr.mxu0 0.0
    %636 = vmatpush1.msra.mxu0 %v487
    %637 = vmatprep.subr.mxu0 0.0
    %638 = vmatpush1.msra.mxu0 %v486
    %639 = vmatprep.subr.mxu0 0.0
    %640 = vmatpush2.msra.mxu0 %v517
    %641 = vmatprep.subr.mxu0 0.0
    %642 = vmatpush2.msra.mxu0 %v516
    %643 = vmatprep.subr.mxu0 0.0
    %644 = vmatpush2.msra.mxu0 %v515
    %645 = vmatprep.subr.mxu0 0.0
    %646 = vmatpush2.msra.mxu0 %v514
    %647 = vmatprep.subr.mxu0 0.0
    %648 = vmatpush2.msra.mxu0 %v513
    %649 = vmatprep.subr.mxu0 0.0
    %650 = vmatpush2.msra.mxu0 %v512
    %651 = vmatprep.subr.mxu0 0.0
    %652 = vmatpush2.msra.mxu0 %v511
    %653 = vmatprep.subr.mxu0 0.0
    %654 = vmatpush2.msra.mxu0 %v510
    %655 = vmatprep.subr.mxu0 0.0
    %656 = vmatpush2.msra.mxu0 %v509
    %657 = vmatprep.subr.mxu0 0.0
    %658 = vmatpush2.msra.mxu0 %v508
    %659 = vmatprep.subr.mxu0 0.0
    %660 = vmatpush2.msra.mxu0 %v507
    %661 = vmatprep.subr.mxu0 0.0
    %662 = vmatpush2.msra.mxu0 %v506
    %663 = vmatprep.subr.mxu0 0.0
    %664 = vmatpush2.msra.mxu0 %v505
    %665 = vmatprep.subr.mxu0 0.0
    %666 = vmatpush2.msra.mxu0 %v504
    %667 = vmatprep.subr.mxu0 0.0
    %668 = vmatpush2.msra.mxu0 %v503
    %669 = vmatprep.subr.mxu0 0.0
    %670 = vmatpush2.msra.mxu0 %v502
    %671 = vmatprep.mubr.f32.mxu0 %v441
    %672 = vmatmul.mubr.f32.gmra.mxu0 %v440
    %v673 = vpop.f32.mrf.mxu0
    %v674 = vadd.f32 %v589, %v673
    %v675 = vpop.f32.mrf.mxu0
    %676 = vmatprep.mubr.f32.mxu0 %v445
    %677 = vmatmul.mubr.f32.gmra.mxu0 %v444
    %v678 = vpop.f32.mrf.mxu0
    %v679 = vadd.f32 %v594, %v678
    %v680 = vpop.f32.mrf.mxu0
    %681 = vmatprep.mubr.f32.mxu0 %v449
    %682 = vmatmul.mubr.f32.gmra.mxu0 %v448
    %v683 = vpop.f32.mrf.mxu0
    %v684 = vadd.f32 %v599, %v683
    %v685 = vpop.f32.mrf.mxu0
    %686 = vmatprep.mubr.f32.mxu0 %v453
    %687 = vmatmul.mubr.f32.gmra.mxu0 %v452
    %v688 = vpop.f32.mrf.mxu0
    %v689 = vadd.f32 %v604, %v688
    %v690 = vpop.f32.mrf.mxu0
    %691 = vdwg.mxu0
    %v692 = vadd.f32 %v206, %v674
    %v693 = vadd.f32 %v207, %v679
    %v694 = vadd.f32 %v208, %v684
    %v695 = vadd.f32 %v209, %v689
    %v696 = vsel %vm45, %v692, 0.0
    %v697 = vsel %vm45, %v693, 0.0
    %v698 = vadd.f32 %v696, %v697
    %v699 = vsel %vm45, %v694, 0.0
    %v700 = vadd.f32 %v698, %v699
    %v701 = vsel %vm45, %v695, 0.0
    %v702 = vadd.f32 %v700, %v701
    %v703 = vrot.slane %v702, 4
    %v704 = vadd.f32 %v702, %v703
    %v705 = vrot.slane %v704, 2
    %v706 = vadd.f32 %v704, %v705
    %v707 = vrot.slane %v706, 1
    %v708 = vadd.f32 %v706, %v707
    %v709 = vmul.f32 %v708, %v164
    %v710 = vsub.f32 %v692, %v709
    %v711 = vsub.f32 %v693, %v709
    %v712 = vsub.f32 %v694, %v709
    %v713 = vsub.f32 %v695, %v709
    %v714 = vmul.f32 %v710, %v710
    %v715 = vmul.f32 %v711, %v711
    %v716 = vmul.f32 %v712, %v712
    %v717 = vmul.f32 %v713, %v713
    %v718 = vsel %vm45, %v714, 0.0
    %v719 = vsel %vm45, %v715, 0.0
    %v720 = vadd.f32 %v718, %v719
    %v721 = vsel %vm45, %v716, 0.0
    %v722 = vadd.f32 %v720, %v721
    %v723 = vsel %vm45, %v717, 0.0
    %v724 = vadd.f32 %v722, %v723
    %v725 = vrot.slane %v724, 4
    %v726 = vadd.f32 %v724, %v725
    %v727 = vrot.slane %v726, 2
    %v728 = vadd.f32 %v726, %v727
    %v729 = vrot.slane %v728, 1
    %v730 = vadd.f32 %v728, %v729
    %v731 = vmul.f32 %v730, %v164
    %v732 = vadd.f32 %v731, 1e-05
    %v733 = vrsqrt.pop %v732
    %v734 = vmul.f32 %v710, %v733
    %v735 = vmul.f32 %v711, %v733
    %v736 = vmul.f32 %v712, %v733
    %v737 = vmul.f32 %v713, %v733
    %v738 = vlaneseq
    %v739 = vshrl.u32 %v738, 7
    %v740 = vsub.s32 0, %v739
    %v741 = vrot.slane %v31, %v740
    %v742 = vmul.f32 %v734, %v741
    %v743 = vmul.f32 %v735, %v741
    %v744 = vmul.f32 %v736, %v741
    %v745 = vmul.f32 %v737, %v741
    %v746 = vlaneseq
    %v747 = vshrl.u32 %v746, 7
    %v748 = vsub.s32 0, %v747
    %v749 = vrot.slane %v32, %v748
    %v750 = vadd.f32 %v742, %v749
    %v751 = vadd.f32 %v743, %v749
    %v752 = vadd.f32 %v744, %v749
    %v753 = vadd.f32 %v745, %v749
    %754 = vst.msk [vmem:[#allocation2] sm:$0xff] %vm45, %v750
    %755 = vst.msk [vmem:[#allocation2 + $0x8] sm:$0xff] %vm45, %v751
    %756 = vst.msk [vmem:[#allocation2 + $0x10] sm:$0xff] %vm45, %v752
    %757 = vst.msk [vmem:[#allocation2 + $0x18] sm:$0xff] %vm45, %v753
    // Predicated region
    $region30: #{multi_head_attention_layer.3} parent=1 // pred_check
      _
    $region31: #{multi_head_attention_layer.3} parent=1 // pred_check_branch
      %759 = sbr.rel (0) target = $region33
    $region32: #{multi_head_attention_layer.3} parent=1 // pred_region
      %s761 = ssub.s32 512, 512
      %762 = vsyncadd [#allocation3], %s761
      %s763 = sshll.u32 [#allocation2], 4
      %s764 = int_to_ptr.vmem [resolvable:$true] %s763
      %769 = dma.vmem_to_hbm [thread:$0]  %s764, 512, %s7, [#allocation3], 128, 128, 8
    $region33: #{multi_head_attention_layer.3} parent=1 // pred_fallthru
      _
    // Predicated region
    $region34: #{multi_head_attention_layer.3} parent=1 // pred_check
      _
    $region35: #{multi_head_attention_layer.3} parent=1 // pred_check_branch
      %771 = sbr.rel (0) target = $region37
    $region36: #{multi_head_attention_layer.3} parent=1 // pred_region
      %772 = dma.done [#allocation3], 512
    $region37: #{multi_head_attention_layer.3} parent=1 // pred_fallthru
      _
    %773 = vsyncpa [#allocation3], 1

// kernel: multi_head_attention_layer.2
$region0: #{multi_head_attention_layer.2}
  #allocation0 [shape = 'u32[]', space=smem, size = 0x4, offset = 0x4, fixed_abs, tag = 'smem constant byte address 0x4 - core index']
  #allocation1 [shape = 'u32[144,128]{1,0:T(1,128)}', space=vmem, size = 0x12000, scoped, tag = 'internal scratch']
  #allocation2 [shape = 'f32[16,64]{1,0:T(8,128)}', space=vmem, size = 0x2000, scoped, tag = 'scratch operand']
  #allocation3 [shape = 'f32[16,8]{1,0:T(8,128)}', space=vmem, size = 0x2000, scoped, tag = 'scratch operand']
  %s0 = inlined_call_operand.vmem [shape: f32[2,4,16,8], index: 0, kind: input, shape index: {}]
  %s1 = inlined_call_operand.vmem [shape: f32[2,4,8,16], index: 1, kind: input, shape index: {}]
  %s2 = inlined_call_operand.vmem [shape: f32[2,4,16,8], index: 2, kind: input, shape index: {}]
  %s3 = inlined_call_operand.vmem [shape: f32[2,16,256], index: 3, kind: input, shape index: {}]
  %s4 = inlined_call_operand.vmem [shape: f32[256,64], index: 4, kind: input, shape index: {}]
  %s5 = inlined_call_operand.vmem [shape: f32[32,32], index: 5, kind: output, shape index: {}]
  %s6 = sld [smem:[#allocation0]]
  $region53: #{multi_head_attention_layer.2} parent=0
    _
  %s8 = ssub.s32 1, %s6
  %s9 = scalar_select 0, %s8, %s6
  loop: start=0, step=1, limit=4
  $region2: #{multi_head_attention_layer.2} parent=0 // loop_pre_header
    _
  $region3: #{multi_head_attention_layer.2} parent=0 // loop_header
    %s11 = sphi 0, %s15
    %p12 = scmp.ge.s32.totalorder %s11, 4
    %s21 = sphi 0, %s23
    %s24 = sphi 0, %s21
    %s25 = sphi 0, %s24
    %s41 = sphi 0, %s25
    %s47 = sphi 0, %s49
    %s50 = sphi 0, %s47
    %s51 = sphi 0, %s50
    %s67 = sphi 0, %s51
    %s73 = sphi 0, %s75
    %s76 = sphi 0, %s73
    %s77 = sphi 0, %s76
    %s93 = sphi 0, %s77
    %s99 = sphi 0, %s101
    %s102 = sphi 0, %s99
    %s103 = sphi 0, %s102
    %s119 = sphi 0, %s103
    %s123 = sphi 0, %s123
    %s125 = sphi 0, %s123
    %s126 = sphi 0, %s125
    %s140 = sphi 0, %s126
    %s146 = sphi 0, %s148
    %s149 = sphi 0, %s146
    %s150 = sphi 0, %s149
    %s166 = sphi 0, %s150
  $region4: #{multi_head_attention_layer.2} parent=0 // loop_header_branch
    %14 = sbr.rel (%p12) target = $region8
  $region5: #{multi_head_attention_layer.2} parent=0 // loop_body
    %s16 = ssub.s32 %s11, 1
    %s17 = ssub.s32 %s11, 2
    %s18 = sadd.s32 %s11, 1
    %s19 = ssub.s32 %s11, %s18
    %p20 = scmp.eq.s32.totalorder %s19, 0
    %s22 = sadd.s32 %s21, 1
    %s23 = scalar_select %p20, %s21, %s22
    %p26 = pneg %p20
    %p27 = scmp.eq.s32.totalorder %s11, 1
    %p28 = por %p26, %p27
    %p29 = scmp.ne.s32.totalorder %s21, %s24
    %p30 = scmp.eq.s32.totalorder %s11, 0
    %p31 = por %p29, %p30
    %p32 = scmp.ne.s32.totalorder %s21, %s24
    %p33 = scmp.eq.s32.totalorder %s16, 1
    %p34 = por %p32, %p33
    %p35 = scmp.ne.s32.totalorder %s24, %s25
    %p36 = scmp.eq.s32.totalorder %s16, 0
    %p37 = por %p35, %p36
    %p38 = scmp.ne.s32.totalorder %s24, %s25
    %p39 = scmp.eq.s32.totalorder %s17, 1
    %p40 = por %p38, %p39
    %p42 = scmp.ne.s32.totalorder %s25, %s41
    %p43 = scmp.eq.s32.totalorder %s17, 0
    %p44 = por %p42, %p43
    %s45 = ssub.s32 %s11, %s18
    %p46 = scmp.eq.s32.totalorder %s45, 0
    %s48 = sadd.s32 %s47, 1
    %s49 = scalar_select %p46, %s47, %s48
    %p52 = pneg %p46
    %p53 = scmp.eq.s32.totalorder %s11, 1
    %p54 = por %p52, %p53
    %p55 = scmp.ne.s32.totalorder %s47, %s50
    %p56 = scmp.eq.s32.totalorder %s11, 0
    %p57 = por %p55, %p56
    %p58 = scmp.ne.s32.totalorder %s47, %s50
    %p59 = scmp.eq.s32.totalorder %s16, 1
    %p60 = por %p58, %p59
    %p61 = scmp.ne.s32.totalorder %s50, %s51
    %p62 = scmp.eq.s32.totalorder %s16, 0
    %p63 = por %p61, %p62
    %p64 = scmp.ne.s32.totalorder %s50, %s51
    %p65 = scmp.eq.s32.totalorder %s17, 1
    %p66 = por %p64, %p65
    %p68 = scmp.ne.s32.totalorder %s51, %s67
    %p69 = scmp.eq.s32.totalorder %s17, 0
    %p70 = por %p68, %p69
    %s71 = ssub.s32 %s11, %s18
    %p72 = scmp.eq.s32.totalorder %s71, 0
    %s74 = sadd.s32 %s73, 1
    %s75 = scalar_select %p72, %s73, %s74
    %p78 = pneg %p72
    %p79 = scmp.eq.s32.totalorder %s11, 1
    %p80 = por %p78, %p79
    %p81 = scmp.ne.s32.totalorder %s73, %s76
    %p82 = scmp.eq.s32.totalorder %s11, 0
    %p83 = por %p81, %p82
    %p84 = scmp.ne.s32.totalorder %s73, %s76
    %p85 = scmp.eq.s32.totalorder %s16, 1
    %p86 = por %p84, %p85
    %p87 = scmp.ne.s32.totalorder %s76, %s77
    %p88 = scmp.eq.s32.totalorder %s16, 0
    %p89 = por %p87, %p88
    %p90 = scmp.ne.s32.totalorder %s76, %s77
    %p91 = scmp.eq.s32.totalorder %s17, 1
    %p92 = por %p90, %p91
    %p94 = scmp.ne.s32.totalorder %s77, %s93
    %p95 = scmp.eq.s32.totalorder %s17, 0
    %p96 = por %p94, %p95
    %s97 = ssub.s32 %s11, %s18
    %p98 = scmp.eq.s32.totalorder %s97, 0
    %s100 = sadd.s32 %s99, 1
    %s101 = scalar_select %p98, %s99, %s100
    %p104 = pneg %p98
    %p105 = scmp.eq.s32.totalorder %s11, 1
    %p106 = por %p104, %p105
    %p107 = scmp.ne.s32.totalorder %s99, %s102
    %p108 = scmp.eq.s32.totalorder %s11, 0
    %p109 = por %p107, %p108
    %p110 = scmp.ne.s32.totalorder %s99, %s102
    %p111 = scmp.eq.s32.totalorder %s16, 1
    %p112 = por %p110, %p111
    %p113 = scmp.ne.s32.totalorder %s102, %s103
    %p114 = scmp.eq.s32.totalorder %s16, 0
    %p115 = por %p113, %p114
    %p116 = scmp.ne.s32.totalorder %s102, %s103
    %p117 = scmp.eq.s32.totalorder %s17, 1
    %p118 = por %p116, %p117
    %p120 = scmp.ne.s32.totalorder %s103, %s119
    %p121 = scmp.eq.s32.totalorder %s17, 0
    %p122 = por %p120, %p121
    %s124 = sadd.s32 %s123, 1
    %p127 = scmp.eq.s32.totalorder %s11, 1
    %p128 = scmp.ne.s32.totalorder %s123, %s125
    %p129 = scmp.eq.s32.totalorder %s11, 0
    %p130 = por %p128, %p129
    %p131 = scmp.ne.s32.totalorder %s123, %s125
    %p132 = scmp.eq.s32.totalorder %s16, 1
    %p133 = por %p131, %p132
    %p134 = scmp.ne.s32.totalorder %s125, %s126
    %p135 = scmp.eq.s32.totalorder %s16, 0
    %p136 = por %p134, %p135
    %p137 = scmp.ne.s32.totalorder %s125, %s126
    %p138 = scmp.eq.s32.totalorder %s17, 1
    %p139 = por %p137, %p138
    %p141 = scmp.ne.s32.totalorder %s126, %s140
    %p142 = scmp.eq.s32.totalorder %s17, 0
    %p143 = por %p141, %p142
    %s144 = ssub.s32 %s11, %s18
    %p145 = scmp.eq.s32.totalorder %s144, 0
    %s147 = sadd.s32 %s146, 1
    %s148 = scalar_select %p145, %s146, %s147
    %p151 = pneg %p145
    %p152 = scmp.eq.s32.totalorder %s11, 1
    %p153 = por %p151, %p152
    %p154 = scmp.ne.s32.totalorder %s146, %s149
    %p155 = scmp.eq.s32.totalorder %s11, 0
    %p156 = por %p154, %p155
    %p157 = scmp.ne.s32.totalorder %s146, %s149
    %p158 = scmp.eq.s32.totalorder %s16, 1
    %p159 = por %p157, %p158
    %p160 = scmp.ne.s32.totalorder %s149, %s150
    %p161 = scmp.eq.s32.totalorder %s16, 0
    %p162 = por %p160, %p161
    %p163 = scmp.ne.s32.totalorder %s149, %s150
    %p164 = scmp.eq.s32.totalorder %s17, 1
    %p165 = por %p163, %p164
    %p167 = scmp.ne.s32.totalorder %s150, %s166
    %p168 = scmp.eq.s32.totalorder %s17, 0
    %p169 = por %p167, %p168
    %p170 = scmp.le.s32.totalorder 1, %s11
    %p171 = scmp.lt.s32.totalorder %s11, 3
    %p172 = pnand %p170, %p171
    %p173 = pneg %p172
    // Predicated region
    $region9: #{multi_head_attention_layer.2} parent=5 // pred_check
      _
    $region10: #{multi_head_attention_layer.2} parent=5 // pred_check_branch
      %175 = sbr.rel (%p172) target = $region12
    $region11: #{multi_head_attention_layer.2} parent=5 // pred_region
      %s176 = ssub.s32 %s11, 1
      // Predicated region
      $region13: #{multi_head_attention_layer.2} parent=11 // pred_check
        %p177 = pneg %p136
      $region14: #{multi_head_attention_layer.2} parent=11 // pred_check_branch
        %179 = sbr.rel (%p177) target = $region16
      $region15: #{multi_head_attention_layer.2} parent=11 // pred_region
        _
      $region16: #{multi_head_attention_layer.2} parent=11 // pred_fallthru
        _
    $region12: #{multi_head_attention_layer.2} parent=5 // pred_fallthru
      _
    %p180 = scmp.lt.s32.totalorder %s11, 2
    // Predicated region
    $region17: #{multi_head_attention_layer.2} parent=5 // pred_check
      %p181 = pneg %p180
    $region18: #{multi_head_attention_layer.2} parent=5 // pred_check_branch
      %183 = sbr.rel (%p181) target = $region20
    $region19: #{multi_head_attention_layer.2} parent=5 // pred_region
      // Predicated region
      $region21: #{multi_head_attention_layer.2} parent=19 // pred_check
        %p184 = pneg %p31
      $region22: #{multi_head_attention_layer.2} parent=19 // pred_check_branch
        %186 = sbr.rel (%p184) target = $region24
      $region23: #{multi_head_attention_layer.2} parent=19 // pred_region
        %p187 = scmp.lt.s32.totalorder %s11, 1
        %s188 = scalar_select %p187, %s11, 1
        %s189 = smul.addr %s188, 8
        %s190 = smul.addr %s189, 8
        %s191 = scalar_lea.vmem %s0, %s190
      $region24: #{multi_head_attention_layer.2} parent=19 // pred_fallthru
        _
      // Predicated region
      $region25: #{multi_head_attention_layer.2} parent=19 // pred_check
        %p192 = pneg %p57
      $region26: #{multi_head_attention_layer.2} parent=19 // pred_check_branch
        %194 = sbr.rel (%p192) target = $region28
      $region27: #{multi_head_attention_layer.2} parent=19 // pred_region
        %p195 = scmp.lt.s32.totalorder %s11, 1
        %s196 = scalar_select %p195, %s11, 1
        %s197 = smul.addr %s196, 4
        %s198 = smul.addr %s197, 8
        %s199 = scalar_lea.vmem %s1, %s198
      $region28: #{multi_head_attention_layer.2} parent=19 // pred_fallthru
        _
      // Predicated region
      $region29: #{multi_head_attention_layer.2} parent=19 // pred_check
        %p200 = pneg %p83
      $region30: #{multi_head_attention_layer.2} parent=19 // pred_check_branch
        %202 = sbr.rel (%p200) target = $region32
      $region31: #{multi_head_attention_layer.2} parent=19 // pred_region
        %p203 = scmp.lt.s32.totalorder %s11, 1
        %s204 = scalar_select %p203, %s11, 1
        %s205 = smul.addr %s204, 8
        %s206 = smul.addr %s205, 8
        %s207 = scalar_lea.vmem %s2, %s206
      $region32: #{multi_head_attention_layer.2} parent=19 // pred_fallthru
        _
      // Predicated region
      $region33: #{multi_head_attention_layer.2} parent=19 // pred_check
        %p208 = pneg %p109
      $region34: #{multi_head_attention_layer.2} parent=19 // pred_check_branch
        %210 = sbr.rel (%p208) target = $region36
      $region35: #{multi_head_attention_layer.2} parent=19 // pred_region
        %p211 = scmp.lt.s32.totalorder %s11, 1
        %s212 = scalar_select %p211, %s11, 1
        %s213 = smul.addr %s212, 4
        %s214 = smul.addr %s213, 8
        %s215 = scalar_lea.vmem %s3, %s214
      $region36: #{multi_head_attention_layer.2} parent=19 // pred_fallthru
        _
    $region20: #{multi_head_attention_layer.2} parent=5 // pred_fallthru
      _
    %p216 = scmp.le.s32.totalorder 1, %s11
    %p217 = scmp.lt.s32.totalorder %s11, 3
    %p218 = pnand %p216, %p217
    %p219 = pneg %p218
    // Predicated region
    $region37: #{multi_head_attention_layer.2} parent=5 // pred_check
      _
    $region38: #{multi_head_attention_layer.2} parent=5 // pred_check_branch
      %221 = sbr.rel (%p218) target = $region40
    $region39: #{multi_head_attention_layer.2} parent=5 // pred_region
      %s222 = ssub.s32 %s11, 1
      %p223 = scmp.lt.s32.totalorder %s16, 1
      %s224 = scalar_select %p223, %s16, 1
      %s225 = smul.addr %s224, 8
      %s226 = smul.addr %s225, 8
      %s227 = scalar_lea.vmem %s0, %s226
      %p228 = pneg %p37
      %p229 = pneg %p34
      %p230 = scmp.lt.s32.totalorder %s16, 1
      %s231 = scalar_select %p230, %s16, 1
      %s232 = smul.addr %s231, 4
      %s233 = smul.addr %s232, 8
      %s234 = scalar_lea.vmem %s1, %s233
      %p235 = pneg %p63
      %p236 = pneg %p60
      %p237 = scmp.lt.s32.totalorder %s16, 1
      %s238 = scalar_select %p237, %s16, 1
      %s239 = smul.addr %s238, 8
      %s240 = smul.addr %s239, 8
      %s241 = scalar_lea.vmem %s2, %s240
      %p242 = pneg %p89
      %p243 = pneg %p86
      %p244 = scmp.lt.s32.totalorder %s16, 1
      %s245 = scalar_select %p244, %s16, 1
      %s246 = smul.addr %s245, 4
      %s247 = smul.addr %s246, 8
      %s248 = scalar_lea.vmem %s3, %s247
      %p249 = pneg %p115
      %p250 = pneg %p112
      %p251 = pneg %p136
      %p252 = pneg %p133
      %p253 = pneg %p162
      %p254 = pneg %p159
      %s255 = smul.u32 2, %s16
      %p256 = scmp.lt.s32.totalorder %s255, 3
      %s257 = scalar_select %p256, %s255, 3
      %s258 = smul.addr %s257, 8
      %s259 = scalar_lea.vmem %s5, %s258
      %p260 = scmp.lt.s32.totalorder %s16, 1
      %s261 = scalar_select %p260, %s16, 1
      %s262 = smul.addr %s261, 8
      %s263 = smul.addr %s262, 8
      %s264 = scalar_lea.vmem %s0, %s263
      %p265 = scmp.lt.s32.totalorder %s16, 1
      %s266 = scalar_select %p265, %s16, 1
      %s267 = smul.addr %s266, 4
      %s268 = smul.addr %s267, 8
      %s269 = scalar_lea.vmem %s1, %s268
      %p270 = scmp.lt.s32.totalorder %s16, 1
      %s271 = scalar_select %p270, %s16, 1
      %s272 = smul.addr %s271, 8
      %s273 = smul.addr %s272, 8
      %s274 = scalar_lea.vmem %s2, %s273
      %p275 = scmp.lt.s32.totalorder %s16, 1
      %s276 = scalar_select %p275, %s16, 1
      %s277 = smul.addr %s276, 4
      %s278 = smul.addr %s277, 8
      %s279 = scalar_lea.vmem %s3, %s278
      %s280 = smul.u32 2, %s16
      %p281 = scmp.lt.s32.totalorder %s280, 3
      %s282 = scalar_select %p281, %s280, 3
      %s283 = smul.addr %s282, 8
      %s284 = scalar_lea.vmem %s5, %s283
      %s285 = smul.u32 2, %s16
      %v286 = vld [vmem:[%s279] sm:$0xff]
      %v287 = vld [vmem:[%s279 + $0x8] sm:$0xff]
      %v288 = vld [vmem:[%s279 + $0x10] sm:$0xff]
      %v289 = vld [vmem:[%s279 + $0x18] sm:$0xff]
      %v290 = vld [vmem:[%s4] sm:$0xff]
      %v291 = vld [vmem:[%s4 + $0x8] sm:$0xff]
      %v292 = vld [vmem:[%s4 + $0x10] sm:$0xff]
      %v293 = vld [vmem:[%s4 + $0x18] sm:$0xff]
      %v294 = vld [vmem:[%s4 + $0x20] sm:$0xff]
      %v295 = vld [vmem:[%s4 + $0x28] sm:$0xff]
      %v296 = vld [vmem:[%s4 + $0x30] sm:$0xff]
      %v297 = vld [vmem:[%s4 + $0x38] sm:$0xff]
      %v298 = vld [vmem:[%s4 + $0x40] sm:$0xff]
      %v299 = vld [vmem:[%s4 + $0x48] sm:$0xff]
      %v300 = vld [vmem:[%s4 + $0x50] sm:$0xff]
      %v301 = vld [vmem:[%s4 + $0x58] sm:$0xff]
      %v302 = vld [vmem:[%s4 + $0x60] sm:$0xff]
      %v303 = vld [vmem:[%s4 + $0x68] sm:$0xff]
      %v304 = vld [vmem:[%s4 + $0x70] sm:$0xff]
      %v305 = vld [vmem:[%s4 + $0x78] sm:$0xff]
      %v306 = vld [vmem:[%s4 + $0x80] sm:$0xff]
      %v307 = vld [vmem:[%s4 + $0x88] sm:$0xff]
      %v308 = vld [vmem:[%s4 + $0x90] sm:$0xff]
      %v309 = vld [vmem:[%s4 + $0x98] sm:$0xff]
      %v310 = vld [vmem:[%s4 + $0xa0] sm:$0xff]
      %v311 = vld [vmem:[%s4 + $0xa8] sm:$0xff]
      %v312 = vld [vmem:[%s4 + $0xb0] sm:$0xff]
      %v313 = vld [vmem:[%s4 + $0xb8] sm:$0xff]
      %v314 = vld [vmem:[%s4 + $0xc0] sm:$0xff]
      %v315 = vld [vmem:[%s4 + $0xc8] sm:$0xff]
      %v316 = vld [vmem:[%s4 + $0xd0] sm:$0xff]
      %v317 = vld [vmem:[%s4 + $0xd8] sm:$0xff]
      %v318 = vld [vmem:[%s4 + $0xe0] sm:$0xff]
      %v319 = vld [vmem:[%s4 + $0xe8] sm:$0xff]
      %v320 = vld [vmem:[%s4 + $0xf0] sm:$0xff]
      %v321 = vld [vmem:[%s4 + $0xf8] sm:$0xff]
      %322 = vmatprep.subr.mxu0 0.0
      %323 = vmatpush1.msra.mxu0 %v305
      %324 = vmatprep.subr.mxu0 0.0
      %325 = vmatpush1.msra.mxu0 %v304
      %326 = vmatprep.subr.mxu0 0.0
      %327 = vmatpush1.msra.mxu0 %v303
      %328 = vmatprep.subr.mxu0 0.0
      %329 = vmatpush1.msra.mxu0 %v302
      %330 = vmatprep.subr.mxu0 0.0
      %331 = vmatpush1.msra.mxu0 %v301
      %332 = vmatprep.subr.mxu0 0.0
      %333 = vmatpush1.msra.mxu0 %v300
      %334 = vmatprep.subr.mxu0 0.0
      %335 = vmatpush1.msra.mxu0 %v299
      %336 = vmatprep.subr.mxu0 0.0
      %337 = vmatpush1.msra.mxu0 %v298
      %338 = vmatprep.subr.mxu0 0.0
      %339 = vmatpush1.msra.mxu0 %v297
      %340 = vmatprep.subr.mxu0 0.0
      %341 = vmatpush1.msra.mxu0 %v296
      %342 = vmatprep.subr.mxu0 0.0
      %343 = vmatpush1.msra.mxu0 %v295
      %344 = vmatprep.subr.mxu0 0.0
      %345 = vmatpush1.msra.mxu0 %v294
      %346 = vmatprep.subr.mxu0 0.0
      %347 = vmatpush1.msra.mxu0 %v293
      %348 = vmatprep.subr.mxu0 0.0
      %349 = vmatpush1.msra.mxu0 %v292
      %350 = vmatprep.subr.mxu0 0.0
      %351 = vmatpush1.msra.mxu0 %v291
      %352 = vmatprep.subr.mxu0 0.0
      %353 = vmatpush1.msra.mxu0 %v290
      %354 = vmatprep.subr.mxu0 0.0
      %355 = vmatpush2.msra.mxu0 %v321
      %356 = vmatprep.subr.mxu0 0.0
      %357 = vmatpush2.msra.mxu0 %v320
      %358 = vmatprep.subr.mxu0 0.0
      %359 = vmatpush2.msra.mxu0 %v319
      %360 = vmatprep.subr.mxu0 0.0
      %361 = vmatpush2.msra.mxu0 %v318
      %362 = vmatprep.subr.mxu0 0.0
      %363 = vmatpush2.msra.mxu0 %v317
      %364 = vmatprep.subr.mxu0 0.0
      %365 = vmatpush2.msra.mxu0 %v316
      %366 = vmatprep.subr.mxu0 0.0
      %367 = vmatpush2.msra.mxu0 %v315
      %368 = vmatprep.subr.mxu0 0.0
      %369 = vmatpush2.msra.mxu0 %v314
      %370 = vmatprep.subr.mxu0 0.0
      %371 = vmatpush2.msra.mxu0 %v313
      %372 = vmatprep.subr.mxu0 0.0
      %373 = vmatpush2.msra.mxu0 %v312
      %374 = vmatprep.subr.mxu0 0.0
      %375 = vmatpush2.msra.mxu0 %v311
      %376 = vmatprep.subr.mxu0 0.0
      %377 = vmatpush2.msra.mxu0 %v310
      %378 = vmatprep.subr.mxu0 0.0
      %379 = vmatpush2.msra.mxu0 %v309
      %380 = vmatprep.subr.mxu0 0.0
      %381 = vmatpush2.msra.mxu0 %v308
      %382 = vmatprep.subr.mxu0 0.0
      %383 = vmatpush2.msra.mxu0 %v307
      %384 = vmatprep.subr.mxu0 0.0
      %385 = vmatpush2.msra.mxu0 %v306
      %386 = vmatprep.mubr.f32.mxu0 %v287
      %387 = vmatmul.mubr.f32.gmra.mxu0 %v286
      %v388 = vpop.f32.mrf.mxu0
      %v389 = vadd.f32 0.0, %v388
      %v390 = vpop.f32.mrf.mxu0
      %391 = vmatprep.mubr.f32.mxu0 %v289
      %392 = vmatmul.mubr.f32.gmra.mxu0 %v288
      %v393 = vpop.f32.mrf.mxu0
      %v394 = vadd.f32 0.0, %v393
      %v395 = vpop.f32.mrf.mxu0
      %396 = vdwg.mxu0
      %vm397 = vcmask 523264
      %398 = vst.msk [vmem:[#allocation2] sm:$0xff] %vm397, %v389
      %399 = vst.msk [vmem:[#allocation2 + $0x8] sm:$0xff] %vm397, %v394
      %v400 = vld [vmem:[%s264] sm:$0xff]
      %v401 = vld [vmem:[%s264 + $0x8] sm:$0xff]
      %v402 = vld [vmem:[%s269] sm:$0xff]
      %v403 = vld [vmem:[%s274] sm:$0xff]
      %v404 = vld [vmem:[%s274 + $0x8] sm:$0xff]
      %v405 = vld [vmem:[#allocation2] sm:$0xff]
      %v406 = vld [vmem:[#allocation2 + $0x8] sm:$0xff]
      %vm407 = vcmask 64512
      %v409 = vsel %vm407, %v400, 0
      %v412 = vsel %vm407, %v401, 0
      %414 = vmatprep.subr.mxu0 0.0
      %415 = vmatpush1.msra.mxu0 0.0
      %416 = vmatprep.subr.mxu0 0.0
      %417 = vmatpush1.msra.mxu0 0.0
      %418 = vmatprep.subr.mxu0 0.0
      %419 = vmatpush1.msra.mxu0 0.0
      %420 = vmatprep.subr.mxu0 0.0
      %421 = vmatpush1.msra.mxu0 0.0
      %422 = vmatprep.subr.mxu0 0.0
      %423 = vmatpush1.msra.mxu0 0.0
      %424 = vmatprep.subr.mxu0 0.0
      %425 = vmatpush1.msra.mxu0 0.0
      %426 = vmatprep.subr.mxu0 0.0
      %427 = vmatpush1.msra.mxu0 0.0
      %428 = vmatprep.subr.mxu0 0.0
      %429 = vmatpush1.msra.mxu0 0.0
      %430 = vmatprep.subr.mxu0 0.0
      %431 = vmatpush1.msra.mxu0 0.0
      %432 = vmatprep.subr.mxu0 0.0
      %433 = vmatpush1.msra.mxu0 0.0
      %434 = vmatprep.subr.mxu0 0.0
      %435 = vmatpush1.msra.mxu0 0.0
      %436 = vmatprep.subr.mxu0 0.0
      %437 = vmatpush1.msra.mxu0 0.0
      %438 = vmatprep.subr.mxu0 0.0
      %439 = vmatpush1.msra.mxu0 0.0
      %440 = vmatprep.subr.mxu0 0.0
      %441 = vmatpush1.msra.mxu0 0.0
      %442 = vmatprep.subr.mxu0 0.0
      %443 = vmatpush1.msra.mxu0 0.0
      %444 = vmatprep.subr.mxu0 0.0
      %445 = vmatpush1.msra.mxu0 %v402
      %446 = vmatprep.subr.mxu0 0.0
      %447 = vmatpush2.msra.mxu0 0.0
      %448 = vmatprep.subr.mxu0 0.0
      %449 = vmatpush2.msra.mxu0 0.0
      %450 = vmatprep.subr.mxu0 0.0
      %451 = vmatpush2.msra.mxu0 0.0
      %452 = vmatprep.subr.mxu0 0.0
      %453 = vmatpush2.msra.mxu0 0.0
      %454 = vmatprep.subr.mxu0 0.0
      %455 = vmatpush2.msra.mxu0 0.0
      %456 = vmatprep.subr.mxu0 0.0
      %457 = vmatpush2.msra.mxu0 0.0
      %458 = vmatprep.subr.mxu0 0.0
      %459 = vmatpush2.msra.mxu0 0.0
      %460 = vmatprep.subr.mxu0 0.0
      %461 = vmatpush2.msra.mxu0 0.0
      %462 = vmatprep.subr.mxu0 0.0
      %463 = vmatpush2.msra.mxu0 0.0
      %464 = vmatprep.subr.mxu0 0.0
      %465 = vmatpush2.msra.mxu0 0.0
      %466 = vmatprep.subr.mxu0 0.0
      %467 = vmatpush2.msra.mxu0 0.0
      %468 = vmatprep.subr.mxu0 0.0
      %469 = vmatpush2.msra.mxu0 0.0
      %470 = vmatprep.subr.mxu0 0.0
      %471 = vmatpush2.msra.mxu0 0.0
      %472 = vmatprep.subr.mxu0 0.0
      %473 = vmatpush2.msra.mxu0 0.0
      %474 = vmatprep.subr.mxu0 0.0
      %475 = vmatpush2.msra.mxu0 0.0
      %476 = vmatprep.subr.mxu0 0.0
      %477 = vmatpush2.msra.mxu0 0.0
      %478 = vmatprep.mubr.f32.mxu0 0.0
      %479 = vmatmul.mubr.f32.gmra.mxu0 %v409
      %v480 = vpop.f32.mrf.mxu0
      %v481 = vadd.f32 0.0, %v480
      %v482 = vpop.f32.mrf.mxu0
      %483 = vmatprep.mubr.f32.mxu0 0.0
      %484 = vmatmul.mubr.f32.gmra.mxu0 %v412
      %v485 = vpop.f32.mrf.mxu0
      %v486 = vadd.f32 0.0, %v485
      %v487 = vpop.f32.mrf.mxu0
      %488 = vdwg.mxu0
      %v489 = vmul.f32 %v481, 0.35355338
      %v490 = vmul.f32 %v486, 0.35355338
      %vm491 = vcmask 130048
      %v493 = vsel %vm491, %v489, 0
      %v496 = vsel %vm491, %v490, 0
      %v499 = vsel %vm491, %v405, 0
      %v502 = vsel %vm491, %v406, 0
      %504 = vmatprep.subr.mxu0 0.0
      %505 = vmatpush1.xpose.msra.mxu0 0.0
      %506 = vmatprep.subr.mxu0 0.0
      %507 = vmatpush1.xpose.msra.mxu0 0.0
      %508 = vmatprep.subr.mxu0 0.0
      %509 = vmatpush1.xpose.msra.mxu0 0.0
      %510 = vmatprep.subr.mxu0 0.0
      %511 = vmatpush1.xpose.msra.mxu0 0.0
      %512 = vmatprep.subr.mxu0 0.0
      %513 = vmatpush1.xpose.msra.mxu0 0.0
      %514 = vmatprep.subr.mxu0 0.0
      %515 = vmatpush1.xpose.msra.mxu0 0.0
      %516 = vmatprep.subr.mxu0 0.0
      %517 = vmatpush1.xpose.msra.mxu0 0.0
      %518 = vmatprep.subr.mxu0 0.0
      %519 = vmatpush1.xpose.msra.mxu0 0.0
      %520 = vmatprep.subr.mxu0 0.0
      %521 = vmatpush1.xpose.msra.mxu0 0.0
      %522 = vmatprep.subr.mxu0 0.0
      %523 = vmatpush1.xpose.msra.mxu0 0.0
      %524 = vmatprep.subr.mxu0 0.0
      %525 = vmatpush1.xpose.msra.mxu0 0.0
      %526 = vmatprep.subr.mxu0 0.0
      %527 = vmatpush1.xpose.msra.mxu0 0.0
      %528 = vmatprep.subr.mxu0 0.0
      %529 = vmatpush1.xpose.msra.mxu0 0.0
      %530 = vmatprep.subr.mxu0 0.0
      %531 = vmatpush1.xpose.msra.mxu0 0.0
      %532 = vmatprep.subr.mxu0 0.0
      %533 = vmatpush1.xpose.msra.mxu0 %v502
      %534 = vmatprep.subr.mxu0 0.0
      %535 = vmatpush1.xpose.msra.mxu0 %v499
      %536 = vmatprep.subr.mxu0 0.0
      %537 = vmatpush2.xpose.msra.mxu0 0.0
      %538 = vmatprep.subr.mxu0 0.0
      %539 = vmatpush2.xpose.msra.mxu0 0.0
      %540 = vmatprep.subr.mxu0 0.0
      %541 = vmatpush2.xpose.msra.mxu0 0.0
      %542 = vmatprep.subr.mxu0 0.0
      %543 = vmatpush2.xpose.msra.mxu0 0.0
      %544 = vmatprep.subr.mxu0 0.0
      %545 = vmatpush2.xpose.msra.mxu0 0.0
      %546 = vmatprep.subr.mxu0 0.0
      %547 = vmatpush2.xpose.msra.mxu0 0.0
      %548 = vmatprep.subr.mxu0 0.0
      %549 = vmatpush2.xpose.msra.mxu0 0.0
      %550 = vmatprep.subr.mxu0 0.0
      %551 = vmatpush2.xpose.msra.mxu0 0.0
      %552 = vmatprep.subr.mxu0 0.0
      %553 = vmatpush2.xpose.msra.mxu0 0.0
      %554 = vmatprep.subr.mxu0 0.0
      %555 = vmatpush2.xpose.msra.mxu0 0.0
      %556 = vmatprep.subr.mxu0 0.0
      %557 = vmatpush2.xpose.msra.mxu0 0.0
      %558 = vmatprep.subr.mxu0 0.0
      %559 = vmatpush2.xpose.msra.mxu0 0.0
      %560 = vmatprep.subr.mxu0 0.0
      %561 = vmatpush2.xpose.msra.mxu0 0.0
      %562 = vmatprep.subr.mxu0 0.0
      %563 = vmatpush2.xpose.msra.mxu0 0.0
      %564 = vmatprep.subr.mxu0 0.0
      %565 = vmatpush2.xpose.msra.mxu0 0.0
      %566 = vmatprep.subr.mxu0 0.0
      %567 = vmatpush2.xpose.msra.mxu0 0.0
      %568 = vmatprep.mubr.f32.mxu0 0.0
      %569 = vmatmul.mubr.f32.gmra.mxu0 %v493
      %v570 = vpop.f32.mrf.mxu0
      %v571 = vadd.f32 0.0, %v570
      %v572 = vpop.f32.mrf.mxu0
      %573 = vmatprep.mubr.f32.mxu0 0.0
      %574 = vmatmul.mubr.f32.gmra.mxu0 %v496
      %v575 = vpop.f32.mrf.mxu0
      %v576 = vadd.f32 0.0, %v575
      %v577 = vpop.f32.mrf.mxu0
      %578 = vdwg.mxu0
      %v579 = vsel %vm491, %v571, -inf
      %580 = vmax.xlane.f32.xlu0 %v579
      %v581 = vpop.xlane.xlu0 %580
      %v582 = vsel %vm491, %v576, -inf
      %583 = vmax.xlane.f32.xlu0 %v582
      %v584 = vpop.xlane.xlu0 %583
      %v585 = vsub.f32 %v571, %v581
      %v586 = vsub.f32 %v576, %v584
      %v587 = vmul.f32 %v585, 1.442695
      %v588 = vpow.pop %v587
      %v589 = vmul.f32 %v586, 1.442695
      %v590 = vpow.pop %v589
      %v591 = vsel %vm491, %v588, 0.0
      %592 = vadd.xlane.f32.xlu0 %v591
      %v593 = vpop.xlane.xlu0 %592
      %v594 = vsel %vm491, %v590, 0.0
      %595 = vadd.xlane.f32.xlu0 %v594
      %v596 = vpop.xlane.xlu0 %595
      %v597 = vrcp.pop %v593
      %v598 = vrcp.pop %v596
      %v599 = vmul.f32 %v588, %v597
      %v600 = vmul.f32 %v590, %v598
      %v602 = vsel %vm491, %v599, 0
      %v605 = vsel %vm491, %v600, 0
      %607 = vmatprep.subr.mxu0 0.0
      %608 = vmatpush1.msra.mxu0 0.0
      %609 = vmatprep.subr.mxu0 0.0
      %610 = vmatpush1.msra.mxu0 0.0
      %611 = vmatprep.subr.mxu0 0.0
      %612 = vmatpush1.msra.mxu0 0.0
      %613 = vmatprep.subr.mxu0 0.0
      %614 = vmatpush1.msra.mxu0 0.0
      %615 = vmatprep.subr.mxu0 0.0
      %616 = vmatpush1.msra.mxu0 0.0
      %617 = vmatprep.subr.mxu0 0.0
      %618 = vmatpush1.msra.mxu0 0.0
      %619 = vmatprep.subr.mxu0 0.0
      %620 = vmatpush1.msra.mxu0 0.0
      %621 = vmatprep.subr.mxu0 0.0
      %622 = vmatpush1.msra.mxu0 0.0
      %623 = vmatprep.subr.mxu0 0.0
      %624 = vmatpush1.msra.mxu0 0.0
      %625 = vmatprep.subr.mxu0 0.0
      %626 = vmatpush1.msra.mxu0 0.0
      %627 = vmatprep.subr.mxu0 0.0
      %628 = vmatpush1.msra.mxu0 0.0
      %629 = vmatprep.subr.mxu0 0.0
      %630 = vmatpush1.msra.mxu0 0.0
      %631 = vmatprep.subr.mxu0 0.0
      %632 = vmatpush1.msra.mxu0 0.0
      %633 = vmatprep.subr.mxu0 0.0
      %634 = vmatpush1.msra.mxu0 0.0
      %635 = vmatprep.subr.mxu0 0.0
      %636 = vmatpush1.msra.mxu0 %v404
      %637 = vmatprep.subr.mxu0 0.0
      %638 = vmatpush1.msra.mxu0 %v403
      %639 = vmatprep.subr.mxu0 0.0
      %640 = vmatpush2.msra.mxu0 0.0
      %641 = vmatprep.subr.mxu0 0.0
      %642 = vmatpush2.msra.mxu0 0.0
      %643 = vmatprep.subr.mxu0 0.0
      %644 = vmatpush2.msra.mxu0 0.0
      %645 = vmatprep.subr.mxu0 0.0
      %646 = vmatpush2.msra.mxu0 0.0
      %647 = vmatprep.subr.mxu0 0.0
      %648 = vmatpush2.msra.mxu0 0.0
      %649 = vmatprep.subr.mxu0 0.0
      %650 = vmatpush2.msra.mxu0 0.0
      %651 = vmatprep.subr.mxu0 0.0
      %652 = vmatpush2.msra.mxu0 0.0
      %653 = vmatprep.subr.mxu0 0.0
      %654 = vmatpush2.msra.mxu0 0.0
      %655 = vmatprep.subr.mxu0 0.0
      %656 = vmatpush2.msra.mxu0 0.0
      %657 = vmatprep.subr.mxu0 0.0
      %658 = vmatpush2.msra.mxu0 0.0
      %659 = vmatprep.subr.mxu0 0.0
      %660 = vmatpush2.msra.mxu0 0.0
      %661 = vmatprep.subr.mxu0 0.0
      %662 = vmatpush2.msra.mxu0 0.0
      %663 = vmatprep.subr.mxu0 0.0
      %664 = vmatpush2.msra.mxu0 0.0
      %665 = vmatprep.subr.mxu0 0.0
      %666 = vmatpush2.msra.mxu0 0.0
      %667 = vmatprep.subr.mxu0 0.0
      %668 = vmatpush2.msra.mxu0 0.0
      %669 = vmatprep.subr.mxu0 0.0
      %670 = vmatpush2.msra.mxu0 0.0
      %671 = vmatprep.mubr.f32.mxu0 0.0
      %672 = vmatmul.mubr.f32.gmra.mxu0 %v602
      %v673 = vpop.f32.mrf.mxu0
      %v674 = vadd.f32 0.0, %v673
      %v675 = vpop.f32.mrf.mxu0
      %676 = vmatprep.mubr.f32.mxu0 0.0
      %677 = vmatmul.mubr.f32.gmra.mxu0 %v605
      %v678 = vpop.f32.mrf.mxu0
      %v679 = vadd.f32 0.0, %v678
      %v680 = vpop.f32.mrf.mxu0
      %681 = vdwg.mxu0
      %682 = vst.msk [vmem:[#allocation3] sm:$0xff] %vm407, %v674
      %683 = vst.msk [vmem:[#allocation3 + $0x8] sm:$0xff] %vm407, %v679
      %v684 = vld [vmem:[#allocation3] sm:$0xf]
      %vm685 = vcmask 60416
      %686 = vst.msk [vmem:[%s284] sm:$0xf] %vm685, %v684
      %v687 = vld [vmem:[#allocation3 + $0x4] sm:$0xf]
      %689 = vrot.lane.b32.xlu0 %v687, 8
      %v690 = vpop.permute.xlu0 %689
      %vm692 = vcmask 126016
      %693 = vst.msk [vmem:[%s284] sm:$0xf] %vm692, %v690
      %v694 = vld [vmem:[#allocation3 + $0x8] sm:$0xf]
      %696 = vrot.lane.b32.xlu0 %v694, 16
      %v697 = vpop.permute.xlu0 %696
      %vm699 = vcmask 191616
      %700 = vst.msk [vmem:[%s284] sm:$0xf] %vm699, %v697
      %v701 = vld [vmem:[#allocation3 + $0xc] sm:$0xf]
      %703 = vrot.lane.b32.xlu0 %v701, 24
      %v704 = vpop.permute.xlu0 %703
      %vm706 = vcmask 257216
      %707 = vst.msk [vmem:[%s284] sm:$0xf] %vm706, %v704
      %s708 = scalar_lea.vmem %s264, 16
      %v709 = vld [vmem:[%s708] sm:$0xff]
      %v710 = vld [vmem:[%s708 + $0x8] sm:$0xff]
      %s711 = scalar_lea.vmem %s269, 8
      %v712 = vld [vmem:[%s711] sm:$0xff]
      %s713 = scalar_lea.vmem %s274, 16
      %v714 = vld [vmem:[%s713] sm:$0xff]
      %v715 = vld [vmem:[%s713 + $0x8] sm:$0xff]
      %v716 = vld [vmem:[#allocation2] sm:$0xff]
      %v717 = vld [vmem:[#allocation2 + $0x8] sm:$0xff]
      %v719 = vsel %vm407, %v709, 0
      %v722 = vsel %vm407, %v710, 0
      %724 = vmatprep.subr.mxu0 0.0
      %725 = vmatpush1.msra.mxu0 0.0
      %726 = vmatprep.subr.mxu0 0.0
      %727 = vmatpush1.msra.mxu0 0.0
      %728 = vmatprep.subr.mxu0 0.0
      %729 = vmatpush1.msra.mxu0 0.0
      %730 = vmatprep.subr.mxu0 0.0
      %731 = vmatpush1.msra.mxu0 0.0
      %732 = vmatprep.subr.mxu0 0.0
      %733 = vmatpush1.msra.mxu0 0.0
      %734 = vmatprep.subr.mxu0 0.0
      %735 = vmatpush1.msra.mxu0 0.0
      %736 = vmatprep.subr.mxu0 0.0
      %737 = vmatpush1.msra.mxu0 0.0
      %738 = vmatprep.subr.mxu0 0.0
      %739 = vmatpush1.msra.mxu0 0.0
      %740 = vmatprep.subr.mxu0 0.0
      %741 = vmatpush1.msra.mxu0 0.0
      %742 = vmatprep.subr.mxu0 0.0
      %743 = vmatpush1.msra.mxu0 0.0
      %744 = vmatprep.subr.mxu0 0.0
      %745 = vmatpush1.msra.mxu0 0.0
      %746 = vmatprep.subr.mxu0 0.0
      %747 = vmatpush1.msra.mxu0 0.0
      %748 = vmatprep.subr.mxu0 0.0
      %749 = vmatpush1.msra.mxu0 0.0
      %750 = vmatprep.subr.mxu0 0.0
      %751 = vmatpush1.msra.mxu0 0.0
      %752 = vmatprep.subr.mxu0 0.0
      %753 = vmatpush1.msra.mxu0 0.0
      %754 = vmatprep.subr.mxu0 0.0
      %755 = vmatpush1.msra.mxu0 %v712
      %756 = vmatprep.subr.mxu0 0.0
      %757 = vmatpush2.msra.mxu0 0.0
      %758 = vmatprep.subr.mxu0 0.0
      %759 = vmatpush2.msra.mxu0 0.0
      %760 = vmatprep.subr.mxu0 0.0
      %761 = vmatpush2.msra.mxu0 0.0
      %762 = vmatprep.subr.mxu0 0.0
      %763 = vmatpush2.msra.mxu0 0.0
      %764 = vmatprep.subr.mxu0 0.0
      %765 = vmatpush2.msra.mxu0 0.0
      %766 = vmatprep.subr.mxu0 0.0
      %767 = vmatpush2.msra.mxu0 0.0
      %768 = vmatprep.subr.mxu0 0.0
      %769 = vmatpush2.msra.mxu0 0.0
      %770 = vmatprep.subr.mxu0 0.0
      %771 = vmatpush2.msra.mxu0 0.0
      %772 = vmatprep.subr.mxu0 0.0
      %773 = vmatpush2.msra.mxu0 0.0
      %774 = vmatprep.subr.mxu0 0.0
      %775 = vmatpush2.msra.mxu0 0.0
      %776 = vmatprep.subr.mxu0 0.0
      %777 = vmatpush2.msra.mxu0 0.0
      %778 = vmatprep.subr.mxu0 0.0
      %779 = vmatpush2.msra.mxu0 0.0
      %780 = vmatprep.subr.mxu0 0.0
      %781 = vmatpush2.msra.mxu0 0.0
      %782 = vmatprep.subr.mxu0 0.0
      %783 = vmatpush2.msra.mxu0 0.0
      %784 = vmatprep.subr.mxu0 0.0
      %785 = vmatpush2.msra.mxu0 0.0
      %786 = vmatprep.subr.mxu0 0.0
      %787 = vmatpush2.msra.mxu0 0.0
      %788 = vmatprep.mubr.f32.mxu0 0.0
      %789 = vmatmul.mubr.f32.gmra.mxu0 %v719
      %v790 = vpop.f32.mrf.mxu0
      %v791 = vadd.f32 0.0, %v790
      %v792 = vpop.f32.mrf.mxu0
      %793 = vmatprep.mubr.f32.mxu0 0.0
      %794 = vmatmul.mubr.f32.gmra.mxu0 %v722
      %v795 = vpop.f32.mrf.mxu0
      %v796 = vadd.f32 0.0, %v795
      %v797 = vpop.f32.mrf.mxu0
      %798 = vdwg.mxu0
      %v799 = vmul.f32 %v791, 0.35355338
      %v800 = vmul.f32 %v796, 0.35355338
      %803 = vrot.lane.b32.xlu0 %v716, 112
      %v804 = vpop.permute.xlu0 %803
      %805 = vrot.lane.b32.xlu0 %v717, 112
      %v806 = vpop.permute.xlu0 %805
      %v808 = vsel %vm491, %v799, 0
      %v811 = vsel %vm491, %v800, 0
      %v813 = vsel %vm491, %v804, 0
      %v815 = vsel %vm491, %v806, 0
      %817 = vmatprep.subr.mxu0 0.0
      %818 = vmatpush1.xpose.msra.mxu0 0.0
      %819 = vmatprep.subr.mxu0 0.0
      %820 = vmatpush1.xpose.msra.mxu0 0.0
      %821 = vmatprep.subr.mxu0 0.0
      %822 = vmatpush1.xpose.msra.mxu0 0.0
      %823 = vmatprep.subr.mxu0 0.0
      %824 = vmatpush1.xpose.msra.mxu0 0.0
      %825 = vmatprep.subr.mxu0 0.0
      %826 = vmatpush1.xpose.msra.mxu0 0.0
      %827 = vmatprep.subr.mxu0 0.0
      %828 = vmatpush1.xpose.msra.mxu0 0.0
      %829 = vmatprep.subr.mxu0 0.0
      %830 = vmatpush1.xpose.msra.mxu0 0.0
      %831 = vmatprep.subr.mxu0 0.0
      %832 = vmatpush1.xpose.msra.mxu0 0.0
      %833 = vmatprep.subr.mxu0 0.0
      %834 = vmatpush1.xpose.msra.mxu0 0.0
      %835 = vmatprep.subr.mxu0 0.0
      %836 = vmatpush1.xpose.msra.mxu0 0.0
      %837 = vmatprep.subr.mxu0 0.0
      %838 = vmatpush1.xpose.msra.mxu0 0.0
      %839 = vmatprep.subr.mxu0 0.0
      %840 = vmatpush1.xpose.msra.mxu0 0.0
      %841 = vmatprep.subr.mxu0 0.0
      %842 = vmatpush1.xpose.msra.mxu0 0.0
      %843 = vmatprep.subr.mxu0 0.0
      %844 = vmatpush1.xpose.msra.mxu0 0.0
      %845 = vmatprep.subr.mxu0 0.0
      %846 = vmatpush1.xpose.msra.mxu0 %v815
      %847 = vmatprep.subr.mxu0 0.0
      %848 = vmatpush1.xpose.msra.mxu0 %v813
      %849 = vmatprep.subr.mxu0 0.0
      %850 = vmatpush2.xpose.msra.mxu0 0.0
      %851 = vmatprep.subr.mxu0 0.0
      %852 = vmatpush2.xpose.msra.mxu0 0.0
      %853 = vmatprep.subr.mxu0 0.0
      %854 = vmatpush2.xpose.msra.mxu0 0.0
      %855 = vmatprep.subr.mxu0 0.0
      %856 = vmatpush2.xpose.msra.mxu0 0.0
      %857 = vmatprep.subr.mxu0 0.0
      %858 = vmatpush2.xpose.msra.mxu0 0.0
      %859 = vmatprep.subr.mxu0 0.0
      %860 = vmatpush2.xpose.msra.mxu0 0.0
      %861 = vmatprep.subr.mxu0 0.0
      %862 = vmatpush2.xpose.msra.mxu0 0.0
      %863 = vmatprep.subr.mxu0 0.0
      %864 = vmatpush2.xpose.msra.mxu0 0.0
      %865 = vmatprep.subr.mxu0 0.0
      %866 = vmatpush2.xpose.msra.mxu0 0.0
      %867 = vmatprep.subr.mxu0 0.0
      %868 = vmatpush2.xpose.msra.mxu0 0.0
      %869 = vmatprep.subr.mxu0 0.0
      %870 = vmatpush2.xpose.msra.mxu0 0.0
      %871 = vmatprep.subr.mxu0 0.0
      %872 = vmatpush2.xpose.msra.mxu0 0.0
      %873 = vmatprep.subr.mxu0 0.0
      %874 = vmatpush2.xpose.msra.mxu0 0.0
      %875 = vmatprep.subr.mxu0 0.0
      %876 = vmatpush2.xpose.msra.mxu0 0.0
      %877 = vmatprep.subr.mxu0 0.0
      %878 = vmatpush2.xpose.msra.mxu0 0.0
      %879 = vmatprep.subr.mxu0 0.0
      %880 = vmatpush2.xpose.msra.mxu0 0.0
      %881 = vmatprep.mubr.f32.mxu0 0.0
      %882 = vmatmul.mubr.f32.gmra.mxu0 %v808
      %v883 = vpop.f32.mrf.mxu0
      %v884 = vadd.f32 0.0, %v883
      %v885 = vpop.f32.mrf.mxu0
      %886 = vmatprep.mubr.f32.mxu0 0.0
      %887 = vmatmul.mubr.f32.gmra.mxu0 %v811
      %v888 = vpop.f32.mrf.mxu0
      %v889 = vadd.f32 0.0, %v888
      %v890 = vpop.f32.mrf.mxu0
      %891 = vdwg.mxu0
      %v892 = vsel %vm491, %v884, -inf
      %893 = vmax.xlane.f32.xlu0 %v892
      %v894 = vpop.xlane.xlu0 %893
      %v895 = vsel %vm491, %v889, -inf
      %896 = vmax.xlane.f32.xlu0 %v895
      %v897 = vpop.xlane.xlu0 %896
      %v898 = vsub.f32 %v884, %v894
      %v899 = vsub.f32 %v889, %v897
      %v900 = vmul.f32 %v898, 1.442695
      %v901 = vpow.pop %v900
      %v902 = vmul.f32 %v899, 1.442695
      %v903 = vpow.pop %v902
      %v904 = vsel %vm491, %v901, 0.0
      %905 = vadd.xlane.f32.xlu0 %v904
      %v906 = vpop.xlane.xlu0 %905
      %v907 = vsel %vm491, %v903, 0.0
      %908 = vadd.xlane.f32.xlu0 %v907
      %v909 = vpop.xlane.xlu0 %908
      %v910 = vrcp.pop %v906
      %v911 = vrcp.pop %v909
      %v912 = vmul.f32 %v901, %v910
      %v913 = vmul.f32 %v903, %v911
      %v915 = vsel %vm491, %v912, 0
      %v918 = vsel %vm491, %v913, 0
      %920 = vmatprep.subr.mxu0 0.0
      %921 = vmatpush1.msra.mxu0 0.0
      %922 = vmatprep.subr.mxu0 0.0
      %923 = vmatpush1.msra.mxu0 0.0
      %924 = vmatprep.subr.mxu0 0.0
      %925 = vmatpush1.msra.mxu0 0.0
      %926 = vmatprep.subr.mxu0 0.0
      %927 = vmatpush1.msra.mxu0 0.0
      %928 = vmatprep.subr.mxu0 0.0
      %929 = vmatpush1.msra.mxu0 0.0
      %930 = vmatprep.subr.mxu0 0.0
      %931 = vmatpush1.msra.mxu0 0.0
      %932 = vmatprep.subr.mxu0 0.0
      %933 = vmatpush1.msra.mxu0 0.0
      %934 = vmatprep.subr.mxu0 0.0
      %935 = vmatpush1.msra.mxu0 0.0
      %936 = vmatprep.subr.mxu0 0.0
      %937 = vmatpush1.msra.mxu0 0.0
      %938 = vmatprep.subr.mxu0 0.0
      %939 = vmatpush1.msra.mxu0 0.0
      %940 = vmatprep.subr.mxu0 0.0
      %941 = vmatpush1.msra.mxu0 0.0
      %942 = vmatprep.subr.mxu0 0.0
      %943 = vmatpush1.msra.mxu0 0.0
      %944 = vmatprep.subr.mxu0 0.0
      %945 = vmatpush1.msra.mxu0 0.0
      %946 = vmatprep.subr.mxu0 0.0
      %947 = vmatpush1.msra.mxu0 0.0
      %948 = vmatprep.subr.mxu0 0.0
      %949 = vmatpush1.msra.mxu0 %v715
      %950 = vmatprep.subr.mxu0 0.0
      %951 = vmatpush1.msra.mxu0 %v714
      %952 = vmatprep.subr.mxu0 0.0
      %953 = vmatpush2.msra.mxu0 0.0
      %954 = vmatprep.subr.mxu0 0.0
      %955 = vmatpush2.msra.mxu0 0.0
      %956 = vmatprep.subr.mxu0 0.0
      %957 = vmatpush2.msra.mxu0 0.0
      %958 = vmatprep.subr.mxu0 0.0
      %959 = vmatpush2.msra.mxu0 0.0
      %960 = vmatprep.subr.mxu0 0.0
      %961 = vmatpush2.msra.mxu0 0.0
      %962 = vmatprep.subr.mxu0 0.0
      %963 = vmatpush2.msra.mxu0 0.0
      %964 = vmatprep.subr.mxu0 0.0
      %965 = vmatpush2.msra.mxu0 0.0
      %966 = vmatprep.subr.mxu0 0.0
      %967 = vmatpush2.msra.mxu0 0.0
      %968 = vmatprep.subr.mxu0 0.0
      %969 = vmatpush2.msra.mxu0 0.0
      %970 = vmatprep.subr.mxu0 0.0
      %971 = vmatpush2.msra.mxu0 0.0
      %972 = vmatprep.subr.mxu0 0.0
      %973 = vmatpush2.msra.mxu0 0.0
      %974 = vmatprep.subr.mxu0 0.0
      %975 = vmatpush2.msra.mxu0 0.0
      %976 = vmatprep.subr.mxu0 0.0
      %977 = vmatpush2.msra.mxu0 0.0
      %978 = vmatprep.subr.mxu0 0.0
      %979 = vmatpush2.msra.mxu0 0.0
      %980 = vmatprep.subr.mxu0 0.0
      %981 = vmatpush2.msra.mxu0 0.0
      %982 = vmatprep.subr.mxu0 0.0
      %983 = vmatpush2.msra.mxu0 0.0
      %984 = vmatprep.mubr.f32.mxu0 0.0
      %985 = vmatmul.mubr.f32.gmra.mxu0 %v915
      %v986 = vpop.f32.mrf.mxu0
      %v987 = vadd.f32 0.0, %v986
      %v988 = vpop.f32.mrf.mxu0
      %989 = vmatprep.mubr.f32.mxu0 0.0
      %990 = vmatmul.mubr.f32.gmra.mxu0 %v918
      %v991 = vpop.f32.mrf.mxu0
      %v992 = vadd.f32 0.0, %v991
      %v993 = vpop.f32.mrf.mxu0
      %994 = vdwg.mxu0
      %995 = vst.msk [vmem:[#allocation3] sm:$0xff] %vm407, %v987
      %996 = vst.msk [vmem:[#allocation3 + $0x8] sm:$0xff] %vm407, %v992
      %v997 = vld [vmem:[#allocation3] sm:$0xf]
      %998 = vst.msk [vmem:[%s284 + $0x4] sm:$0xf] %vm685, %v997
      %v999 = vld [vmem:[#allocation3 + $0x4] sm:$0xf]
      %1001 = vrot.lane.b32.xlu0 %v999, 8
      %v1002 = vpop.permute.xlu0 %1001
      %1004 = vst.msk [vmem:[%s284 + $0x4] sm:$0xf] %vm692, %v1002
      %v1005 = vld [vmem:[#allocation3 + $0x8] sm:$0xf]
      %1007 = vrot.lane.b32.xlu0 %v1005, 16
      %v1008 = vpop.permute.xlu0 %1007
      %1010 = vst.msk [vmem:[%s284 + $0x4] sm:$0xf] %vm699, %v1008
      %v1011 = vld [vmem:[#allocation3 + $0xc] sm:$0xf]
      %1013 = vrot.lane.b32.xlu0 %v1011, 24
      %v1014 = vpop.permute.xlu0 %1013
      %1016 = vst.msk [vmem:[%s284 + $0x4] sm:$0xf] %vm706, %v1014
      %s1017 = scalar_lea.vmem %s264, 32
      %v1018 = vld [vmem:[%s1017] sm:$0xff]
      %v1019 = vld [vmem:[%s1017 + $0x8] sm:$0xff]
      %s1020 = scalar_lea.vmem %s269, 16
      %v1021 = vld [vmem:[%s1020] sm:$0xff]
      %s1022 = scalar_lea.vmem %s274, 32
      %v1023 = vld [vmem:[%s1022] sm:$0xff]
      %v1024 = vld [vmem:[%s1022 + $0x8] sm:$0xff]
      %v1025 = vld [vmem:[#allocation2] sm:$0xff]
      %v1026 = vld [vmem:[#allocation2 + $0x8] sm:$0xff]
      %v1028 = vsel %vm407, %v1018, 0
      %v1031 = vsel %vm407, %v1019, 0
      %1033 = vmatprep.subr.mxu0 0.0
      %1034 = vmatpush1.msra.mxu0 0.0
      %1035 = vmatprep.subr.mxu0 0.0
      %1036 = vmatpush1.msra.mxu0 0.0
      %1037 = vmatprep.subr.mxu0 0.0
      %1038 = vmatpush1.msra.mxu0 0.0
      %1039 = vmatprep.subr.mxu0 0.0
      %1040 = vmatpush1.msra.mxu0 0.0
      %1041 = vmatprep.subr.mxu0 0.0
      %1042 = vmatpush1.msra.mxu0 0.0
      %1043 = vmatprep.subr.mxu0 0.0
      %1044 = vmatpush1.msra.mxu0 0.0
      %1045 = vmatprep.subr.mxu0 0.0
      %1046 = vmatpush1.msra.mxu0 0.0
      %1047 = vmatprep.subr.mxu0 0.0
      %1048 = vmatpush1.msra.mxu0 0.0
      %1049 = vmatprep.subr.mxu0 0.0
      %1050 = vmatpush1.msra.mxu0 0.0
      %1051 = vmatprep.subr.mxu0 0.0
      %1052 = vmatpush1.msra.mxu0 0.0
      %1053 = vmatprep.subr.mxu0 0.0
      %1054 = vmatpush1.msra.mxu0 0.0
      %1055 = vmatprep.subr.mxu0 0.0
      %1056 = vmatpush1.msra.mxu0 0.0
      %1057 = vmatprep.subr.mxu0 0.0
      %1058 = vmatpush1.msra.mxu0 0.0
      %1059 = vmatprep.subr.mxu0 0.0
      %1060 = vmatpush1.msra.mxu0 0.0
      %1061 = vmatprep.subr.mxu0 0.0
      %1062 = vmatpush1.msra.mxu0 0.0
      %1063 = vmatprep.subr.mxu0 0.0
      %1064 = vmatpush1.msra.mxu0 %v1021
      %1065 = vmatprep.subr.mxu0 0.0
      %1066 = vmatpush2.msra.mxu0 0.0
      %1067 = vmatprep.subr.mxu0 0.0
      %1068 = vmatpush2.msra.mxu0 0.0
      %1069 = vmatprep.subr.mxu0 0.0
      %1070 = vmatpush2.msra.mxu0 0.0
      %1071 = vmatprep.subr.mxu0 0.0
      %1072 = vmatpush2.msra.mxu0 0.0
      %1073 = vmatprep.subr.mxu0 0.0
      %1074 = vmatpush2.msra.mxu0 0.0
      %1075 = vmatprep.subr.mxu0 0.0
      %1076 = vmatpush2.msra.mxu0 0.0
      %1077 = vmatprep.subr.mxu0 0.0
      %1078 = vmatpush2.msra.mxu0 0.0
      %1079 = vmatprep.subr.mxu0 0.0
      %1080 = vmatpush2.msra.mxu0 0.0
      %1081 = vmatprep.subr.mxu0 0.0
      %1082 = vmatpush2.msra.mxu0 0.0
      %1083 = vmatprep.subr.mxu0 0.0
      %1084 = vmatpush2.msra.mxu0 0.0
      %1085 = vmatprep.subr.mxu0 0.0
      %1086 = vmatpush2.msra.mxu0 0.0
      %1087 = vmatprep.subr.mxu0 0.0
      %1088 = vmatpush2.msra.mxu0 0.0
      %1089 = vmatprep.subr.mxu0 0.0
      %1090 = vmatpush2.msra.mxu0 0.0
      %1091 = vmatprep.subr.mxu0 0.0
      %1092 = vmatpush2.msra.mxu0 0.0
      %1093 = vmatprep.subr.mxu0 0.0
      %1094 = vmatpush2.msra.mxu0 0.0
      %1095 = vmatprep.subr.mxu0 0.0
      %1096 = vmatpush2.msra.mxu0 0.0
      %1097 = vmatprep.mubr.f32.mxu0 0.0
      %1098 = vmatmul.mubr.f32.gmra.mxu0 %v1028
      %v1099 = vpop.f32.mrf.mxu0
      %v1100 = vadd.f32 0.0, %v1099
      %v1101 = vpop.f32.mrf.mxu0
      %1102 = vmatprep.mubr.f32.mxu0 0.0
      %1103 = vmatmul.mubr.f32.gmra.mxu0 %v1031
      %v1104 = vpop.f32.mrf.mxu0
      %v1105 = vadd.f32 0.0, %v1104
      %v1106 = vpop.f32.mrf.mxu0
      %1107 = vdwg.mxu0
      %v1108 = vmul.f32 %v1100, 0.35355338
      %v1109 = vmul.f32 %v1105, 0.35355338
      %1112 = vrot.lane.b32.xlu0 %v1025, 96
      %v1113 = vpop.permute.xlu0 %1112
      %1114 = vrot.lane.b32.xlu0 %v1026, 96
      %v1115 = vpop.permute.xlu0 %1114
      %v1117 = vsel %vm491, %v1108, 0
      %v1120 = vsel %vm491, %v1109, 0
      %v1122 = vsel %vm491, %v1113, 0
      %v1124 = vsel %vm491, %v1115, 0
      %1126 = vmatprep.subr.mxu0 0.0
      %1127 = vmatpush1.xpose.msra.mxu0 0.0
      %1128 = vmatprep.subr.mxu0 0.0
      %1129 = vmatpush1.xpose.msra.mxu0 0.0
      %1130 = vmatprep.subr.mxu0 0.0
      %1131 = vmatpush1.xpose.msra.mxu0 0.0
      %1132 = vmatprep.subr.mxu0 0.0
      %1133 = vmatpush1.xpose.msra.mxu0 0.0
      %1134 = vmatprep.subr.mxu0 0.0
      %1135 = vmatpush1.xpose.msra.mxu0 0.0
      %1136 = vmatprep.subr.mxu0 0.0
      %1137 = vmatpush1.xpose.msra.mxu0 0.0
      %1138 = vmatprep.subr.mxu0 0.0
      %1139 = vmatpush1.xpose.msra.mxu0 0.0
      %1140 = vmatprep.subr.mxu0 0.0
      %1141 = vmatpush1.xpose.msra.mxu0 0.0
      %1142 = vmatprep.subr.mxu0 0.0
      %1143 = vmatpush1.xpose.msra.mxu0 0.0
      %1144 = vmatprep.subr.mxu0 0.0
      %1145 = vmatpush1.xpose.msra.mxu0 0.0
      %1146 = vmatprep.subr.mxu0 0.0
      %1147 = vmatpush1.xpose.msra.mxu0 0.0
      %1148 = vmatprep.subr.mxu0 0.0
      %1149 = vmatpush1.xpose.msra.mxu0 0.0
      %1150 = vmatprep.subr.mxu0 0.0
      %1151 = vmatpush1.xpose.msra.mxu0 0.0
      %1152 = vmatprep.subr.mxu0 0.0
      %1153 = vmatpush1.xpose.msra.mxu0 0.0
      %1154 = vmatprep.subr.mxu0 0.0
      %1155 = vmatpush1.xpose.msra.mxu0 %v1124
      %1156 = vmatprep.subr.mxu0 0.0
      %1157 = vmatpush1.xpose.msra.mxu0 %v1122
      %1158 = vmatprep.subr.mxu0 0.0
      %1159 = vmatpush2.xpose.msra.mxu0 0.0
      %1160 = vmatprep.subr.mxu0 0.0
      %1161 = vmatpush2.xpose.msra.mxu0 0.0
      %1162 = vmatprep.subr.mxu0 0.0
      %1163 = vmatpush2.xpose.msra.mxu0 0.0
      %1164 = vmatprep.subr.mxu0 0.0
      %1165 = vmatpush2.xpose.msra.mxu0 0.0
      %1166 = vmatprep.subr.mxu0 0.0
      %1167 = vmatpush2.xpose.msra.mxu0 0.0
      %1168 = vmatprep.subr.mxu0 0.0
      %1169 = vmatpush2.xpose.msra.mxu0 0.0
      %1170 = vmatprep.subr.mxu0 0.0
      %1171 = vmatpush2.xpose.msra.mxu0 0.0
      %1172 = vmatprep.subr.mxu0 0.0
      %1173 = vmatpush2.xpose.msra.mxu0 0.0
      %1174 = vmatprep.subr.mxu0 0.0
      %1175 = vmatpush2.xpose.msra.mxu0 0.0
      %1176 = vmatprep.subr.mxu0 0.0
      %1177 = vmatpush2.xpose.msra.mxu0 0.0
      %1178 = vmatprep.subr.mxu0 0.0
      %1179 = vmatpush2.xpose.msra.mxu0 0.0
      %1180 = vmatprep.subr.mxu0 0.0
      %1181 = vmatpush2.xpose.msra.mxu0 0.0
      %1182 = vmatprep.subr.mxu0 0.0
      %1183 = vmatpush2.xpose.msra.mxu0 0.0
      %1184 = vmatprep.subr.mxu0 0.0
      %1185 = vmatpush2.xpose.msra.mxu0 0.0
      %1186 = vmatprep.subr.mxu0 0.0
      %1187 = vmatpush2.xpose.msra.mxu0 0.0
      %1188 = vmatprep.subr.mxu0 0.0
      %1189 = vmatpush2.xpose.msra.mxu0 0.0
      %1190 = vmatprep.mubr.f32.mxu0 0.0
      %1191 = vmatmul.mubr.f32.gmra.mxu0 %v1117
      %v1192 = vpop.f32.mrf.mxu0
      %v1193 = vadd.f32 0.0, %v1192
      %v1194 = vpop.f32.mrf.mxu0
      %1195 = vmatprep.mubr.f32.mxu0 0.0
      %1196 = vmatmul.mubr.f32.gmra.mxu0 %v1120
      %v1197 = vpop.f32.mrf.mxu0
      %v1198 = vadd.f32 0.0, %v1197
      %v1199 = vpop.f32.mrf.mxu0
      %1200 = vdwg.mxu0
      %v1201 = vsel %vm491, %v1193, -inf
      %1202 = vmax.xlane.f32.xlu0 %v1201
      %v1203 = vpop.xlane.xlu0 %1202
      %v1204 = vsel %vm491, %v1198, -inf
      %1205 = vmax.xlane.f32.xlu0 %v1204
      %v1206 = vpop.xlane.xlu0 %1205
      %v1207 = vsub.f32 %v1193, %v1203
      %v1208 = vsub.f32 %v1198, %v1206
      %v1209 = vmul.f32 %v1207, 1.442695
      %v1210 = vpow.pop %v1209
      %v1211 = vmul.f32 %v1208, 1.442695
      %v1212 = vpow.pop %v1211
      %v1213 = vsel %vm491, %v1210, 0.0
      %1214 = vadd.xlane.f32.xlu0 %v1213
      %v1215 = vpop.xlane.xlu0 %1214
      %v1216 = vsel %vm491, %v1212, 0.0
      %1217 = vadd.xlane.f32.xlu0 %v1216
      %v1218 = vpop.xlane.xlu0 %1217
      %v1219 = vrcp.pop %v1215
      %v1220 = vrcp.pop %v1218
      %v1221 = vmul.f32 %v1210, %v1219
      %v1222 = vmul.f32 %v1212, %v1220
      %v1224 = vsel %vm491, %v1221, 0
      %v1227 = vsel %vm491, %v1222, 0
      %1229 = vmatprep.subr.mxu0 0.0
      %1230 = vmatpush1.msra.mxu0 0.0
      %1231 = vmatprep.subr.mxu0 0.0
      %1232 = vmatpush1.msra.mxu0 0.0
      %1233 = vmatprep.subr.mxu0 0.0
      %1234 = vmatpush1.msra.mxu0 0.0
      %1235 = vmatprep.subr.mxu0 0.0
      %1236 = vmatpush1.msra.mxu0 0.0
      %1237 = vmatprep.subr.mxu0 0.0
      %1238 = vmatpush1.msra.mxu0 0.0
      %1239 = vmatprep.subr.mxu0 0.0
      %1240 = vmatpush1.msra.mxu0 0.0
      %1241 = vmatprep.subr.mxu0 0.0
      %1242 = vmatpush1.msra.mxu0 0.0
      %1243 = vmatprep.subr.mxu0 0.0
      %1244 = vmatpush1.msra.mxu0 0.0
      %1245 = vmatprep.subr.mxu0 0.0
      %1246 = vmatpush1.msra.mxu0 0.0
      %1247 = vmatprep.subr.mxu0 0.0
      %1248 = vmatpush1.msra.mxu0 0.0
      %1249 = vmatprep.subr.mxu0 0.0
      %1250 = vmatpush1.msra.mxu0 0.0
      %1251 = vmatprep.subr.mxu0 0.0
      %1252 = vmatpush1.msra.mxu0 0.0
      %1253 = vmatprep.subr.mxu0 0.0
      %1254 = vmatpush1.msra.mxu0 0.0
      %1255 = vmatprep.subr.mxu0 0.0
      %1256 = vmatpush1.msra.mxu0 0.0
      %1257 = vmatprep.subr.mxu0 0.0
      %1258 = vmatpush1.msra.mxu0 %v1024
      %1259 = vmatprep.subr.mxu0 0.0
      %1260 = vmatpush1.msra.mxu0 %v1023
      %1261 = vmatprep.subr.mxu0 0.0
      %1262 = vmatpush2.msra.mxu0 0.0
      %1263 = vmatprep.subr.mxu0 0.0
      %1264 = vmatpush2.msra.mxu0 0.0
      %1265 = vmatprep.subr.mxu0 0.0
      %1266 = vmatpush2.msra.mxu0 0.0
      %1267 = vmatprep.subr.mxu0 0.0
      %1268 = vmatpush2.msra.mxu0 0.0
      %1269 = vmatprep.subr.mxu0 0.0
      %1270 = vmatpush2.msra.mxu0 0.0
      %1271 = vmatprep.subr.mxu0 0.0
      %1272 = vmatpush2.msra.mxu0 0.0
      %1273 = vmatprep.subr.mxu0 0.0
      %1274 = vmatpush2.msra.mxu0 0.0
      %1275 = vmatprep.subr.mxu0 0.0
      %1276 = vmatpush2.msra.mxu0 0.0
      %1277 = vmatprep.subr.mxu0 0.0
      %1278 = vmatpush2.msra.mxu0 0.0
      %1279 = vmatprep.subr.mxu0 0.0
      %1280 = vmatpush2.msra.mxu0 0.0
      %1281 = vmatprep.subr.mxu0 0.0
      %1282 = vmatpush2.msra.mxu0 0.0
      %1283 = vmatprep.subr.mxu0 0.0
      %1284 = vmatpush2.msra.mxu0 0.0
      %1285 = vmatprep.subr.mxu0 0.0
      %1286 = vmatpush2.msra.mxu0 0.0
      %1287 = vmatprep.subr.mxu0 0.0
      %1288 = vmatpush2.msra.mxu0 0.0
      %1289 = vmatprep.subr.mxu0 0.0
      %1290 = vmatpush2.msra.mxu0 0.0
      %1291 = vmatprep.subr.mxu0 0.0
      %1292 = vmatpush2.msra.mxu0 0.0
      %1293 = vmatprep.mubr.f32.mxu0 0.0
      %1294 = vmatmul.mubr.f32.gmra.mxu0 %v1224
      %v1295 = vpop.f32.mrf.mxu0
      %v1296 = vadd.f32 0.0, %v1295
      %v1297 = vpop.f32.mrf.mxu0
      %1298 = vmatprep.mubr.f32.mxu0 0.0
      %1299 = vmatmul.mubr.f32.gmra.mxu0 %v1227
      %v1300 = vpop.f32.mrf.mxu0
      %v1301 = vadd.f32 0.0, %v1300
      %v1302 = vpop.f32.mrf.mxu0
      %1303 = vdwg.mxu0
      %1304 = vst.msk [vmem:[#allocation3] sm:$0xff] %vm407, %v1296
      %1305 = vst.msk [vmem:[#allocation3 + $0x8] sm:$0xff] %vm407, %v1301
      %v1306 = vld [vmem:[#allocation3] sm:$0xf]
      %1307 = vst.msk [vmem:[%s284 + $0x8] sm:$0xf] %vm685, %v1306
      %v1308 = vld [vmem:[#allocation3 + $0x4] sm:$0xf]
      %1310 = vrot.lane.b32.xlu0 %v1308, 8
      %v1311 = vpop.permute.xlu0 %1310
      %1313 = vst.msk [vmem:[%s284 + $0x8] sm:$0xf] %vm692, %v1311
      %v1314 = vld [vmem:[#allocation3 + $0x8] sm:$0xf]
      %1316 = vrot.lane.b32.xlu0 %v1314, 16
      %v1317 = vpop.permute.xlu0 %1316
      %1319 = vst.msk [vmem:[%s284 + $0x8] sm:$0xf] %vm699, %v1317
      %v1320 = vld [vmem:[#allocation3 + $0xc] sm:$0xf]
      %1322 = vrot.lane.b32.xlu0 %v1320, 24
      %v1323 = vpop.permute.xlu0 %1322
      %1325 = vst.msk [vmem:[%s284 + $0x8] sm:$0xf] %vm706, %v1323
      %s1326 = scalar_lea.vmem %s264, 48
      %v1327 = vld [vmem:[%s1326] sm:$0xff]
      %v1328 = vld [vmem:[%s1326 + $0x8] sm:$0xff]
      %s1329 = scalar_lea.vmem %s269, 24
      %v1330 = vld [vmem:[%s1329] sm:$0xff]
      %s1331 = scalar_lea.vmem %s274, 48
      %v1332 = vld [vmem:[%s1331] sm:$0xff]
      %v1333 = vld [vmem:[%s1331 + $0x8] sm:$0xff]
      %v1334 = vld [vmem:[#allocation2] sm:$0xff]
      %v1335 = vld [vmem:[#allocation2 + $0x8] sm:$0xff]
      %v1337 = vsel %vm407, %v1327, 0
      %v1340 = vsel %vm407, %v1328, 0
      %1342 = vmatprep.subr.mxu0 0.0
      %1343 = vmatpush1.msra.mxu0 0.0
      %1344 = vmatprep.subr.mxu0 0.0
      %1345 = vmatpush1.msra.mxu0 0.0
      %1346 = vmatprep.subr.mxu0 0.0
      %1347 = vmatpush1.msra.mxu0 0.0
      %1348 = vmatprep.subr.mxu0 0.0
      %1349 = vmatpush1.msra.mxu0 0.0
      %1350 = vmatprep.subr.mxu0 0.0
      %1351 = vmatpush1.msra.mxu0 0.0
      %1352 = vmatprep.subr.mxu0 0.0
      %1353 = vmatpush1.msra.mxu0 0.0
      %1354 = vmatprep.subr.mxu0 0.0
      %1355 = vmatpush1.msra.mxu0 0.0
      %1356 = vmatprep.subr.mxu0 0.0
      %1357 = vmatpush1.msra.mxu0 0.0
      %1358 = vmatprep.subr.mxu0 0.0
      %1359 = vmatpush1.msra.mxu0 0.0
      %1360 = vmatprep.subr.mxu0 0.0
      %1361 = vmatpush1.msra.mxu0 0.0
      %1362 = vmatprep.subr.mxu0 0.0
      %1363 = vmatpush1.msra.mxu0 0.0
      %1364 = vmatprep.subr.mxu0 0.0
      %1365 = vmatpush1.msra.mxu0 0.0
      %1366 = vmatprep.subr.mxu0 0.0
      %1367 = vmatpush1.msra.mxu0 0.0
      %1368 = vmatprep.subr.mxu0 0.0
      %1369 = vmatpush1.msra.mxu0 0.0
      %1370 = vmatprep.subr.mxu0 0.0
      %1371 = vmatpush1.msra.mxu0 0.0
      %1372 = vmatprep.subr.mxu0 0.0
      %1373 = vmatpush1.msra.mxu0 %v1330
      %1374 = vmatprep.subr.mxu0 0.0
      %1375 = vmatpush2.msra.mxu0 0.0
      %1376 = vmatprep.subr.mxu0 0.0
      %1377 = vmatpush2.msra.mxu0 0.0
      %1378 = vmatprep.subr.mxu0 0.0
      %1379 = vmatpush2.msra.mxu0 0.0
      %1380 = vmatprep.subr.mxu0 0.0
      %1381 = vmatpush2.msra.mxu0 0.0
      %1382 = vmatprep.subr.mxu0 0.0
      %1383 = vmatpush2.msra.mxu0 0.0
      %1384 = vmatprep.subr.mxu0 0.0
      %1385 = vmatpush2.msra.mxu0 0.0
      %1386 = vmatprep.subr.mxu0 0.0
      %1387 = vmatpush2.msra.mxu0 0.0
      %1388 = vmatprep.subr.mxu0 0.0
      %1389 = vmatpush2.msra.mxu0 0.0
      %1390 = vmatprep.subr.mxu0 0.0
      %1391 = vmatpush2.msra.mxu0 0.0
      %1392 = vmatprep.subr.mxu0 0.0
      %1393 = vmatpush2.msra.mxu0 0.0
      %1394 = vmatprep.subr.mxu0 0.0
      %1395 = vmatpush2.msra.mxu0 0.0
      %1396 = vmatprep.subr.mxu0 0.0
      %1397 = vmatpush2.msra.mxu0 0.0
      %1398 = vmatprep.subr.mxu0 0.0
      %1399 = vmatpush2.msra.mxu0 0.0
      %1400 = vmatprep.subr.mxu0 0.0
      %1401 = vmatpush2.msra.mxu0 0.0
      %1402 = vmatprep.subr.mxu0 0.0
      %1403 = vmatpush2.msra.mxu0 0.0
      %1404 = vmatprep.subr.mxu0 0.0
      %1405 = vmatpush2.msra.mxu0 0.0
      %1406 = vmatprep.mubr.f32.mxu0 0.0
      %1407 = vmatmul.mubr.f32.gmra.mxu0 %v1337
      %v1408 = vpop.f32.mrf.mxu0
      %v1409 = vadd.f32 0.0, %v1408
      %v1410 = vpop.f32.mrf.mxu0
      %1411 = vmatprep.mubr.f32.mxu0 0.0
      %1412 = vmatmul.mubr.f32.gmra.mxu0 %v1340
      %v1413 = vpop.f32.mrf.mxu0
      %v1414 = vadd.f32 0.0, %v1413
      %v1415 = vpop.f32.mrf.mxu0
      %1416 = vdwg.mxu0
      %v1417 = vmul.f32 %v1409, 0.35355338
      %v1418 = vmul.f32 %v1414, 0.35355338
      %1421 = vrot.lane.b32.xlu0 %v1334, 80
      %v1422 = vpop.permute.xlu0 %1421
      %1423 = vrot.lane.b32.xlu0 %v1335, 80
      %v1424 = vpop.permute.xlu0 %1423
      %v1426 = vsel %vm491, %v1417, 0
      %v1429 = vsel %vm491, %v1418, 0
      %v1431 = vsel %vm491, %v1422, 0
      %v1433 = vsel %vm491, %v1424, 0
      %1435 = vmatprep.subr.mxu0 0.0
      %1436 = vmatpush1.xpose.msra.mxu0 0.0
      %1437 = vmatprep.subr.mxu0 0.0
      %1438 = vmatpush1.xpose.msra.mxu0 0.0
      %1439 = vmatprep.subr.mxu0 0.0
      %1440 = vmatpush1.xpose.msra.mxu0 0.0
      %1441 = vmatprep.subr.mxu0 0.0
      %1442 = vmatpush1.xpose.msra.mxu0 0.0
      %1443 = vmatprep.subr.mxu0 0.0
      %1444 = vmatpush1.xpose.msra.mxu0 0.0
      %1445 = vmatprep.subr.mxu0 0.0
      %1446 = vmatpush1.xpose.msra.mxu0 0.0
      %1447 = vmatprep.subr.mxu0 0.0
      %1448 = vmatpush1.xpose.msra.mxu0 0.0
      %1449 = vmatprep.subr.mxu0 0.0
      %1450 = vmatpush1.xpose.msra.mxu0 0.0
      %1451 = vmatprep.subr.mxu0 0.0
      %1452 = vmatpush1.xpose.msra.mxu0 0.0
      %1453 = vmatprep.subr.mxu0 0.0
      %1454 = vmatpush1.xpose.msra.mxu0 0.0
      %1455 = vmatprep.subr.mxu0 0.0
      %1456 = vmatpush1.xpose.msra.mxu0 0.0
      %1457 = vmatprep.subr.mxu0 0.0
      %1458 = vmatpush1.xpose.msra.mxu0 0.0
      %1459 = vmatprep.subr.mxu0 0.0
      %1460 = vmatpush1.xpose.msra.mxu0 0.0
      %1461 = vmatprep.subr.mxu0 0.0
      %1462 = vmatpush1.xpose.msra.mxu0 0.0
      %1463 = vmatprep.subr.mxu0 0.0
      %1464 = vmatpush1.xpose.msra.mxu0 %v1433
      %1465 = vmatprep.subr.mxu0 0.0
      %1466 = vmatpush1.xpose.msra.mxu0 %v1431
      %1467 = vmatprep.subr.mxu0 0.0
      %1468 = vmatpush2.xpose.msra.mxu0 0.0
      %1469 = vmatprep.subr.mxu0 0.0
      %1470 = vmatpush2.xpose.msra.mxu0 0.0
      %1471 = vmatprep.subr.mxu0 0.0
      %1472 = vmatpush2.xpose.msra.mxu0 0.0
      %1473 = vmatprep.subr.mxu0 0.0
      %1474 = vmatpush2.xpose.msra.mxu0 0.0
      %1475 = vmatprep.subr.mxu0 0.0
      %1476 = vmatpush2.xpose.msra.mxu0 0.0
      %1477 = vmatprep.subr.mxu0 0.0
      %1478 = vmatpush2.xpose.msra.mxu0 0.0
      %1479 = vmatprep.subr.mxu0 0.0
      %1480 = vmatpush2.xpose.msra.mxu0 0.0
      %1481 = vmatprep.subr.mxu0 0.0
      %1482 = vmatpush2.xpose.msra.mxu0 0.0
      %1483 = vmatprep.subr.mxu0 0.0
      %1484 = vmatpush2.xpose.msra.mxu0 0.0
      %1485 = vmatprep.subr.mxu0 0.0
      %1486 = vmatpush2.xpose.msra.mxu0 0.0
      %1487 = vmatprep.subr.mxu0 0.0
      %1488 = vmatpush2.xpose.msra.mxu0 0.0
      %1489 = vmatprep.subr.mxu0 0.0
      %1490 = vmatpush2.xpose.msra.mxu0 0.0
      %1491 = vmatprep.subr.mxu0 0.0
      %1492 = vmatpush2.xpose.msra.mxu0 0.0
      %1493 = vmatprep.subr.mxu0 0.0
      %1494 = vmatpush2.xpose.msra.mxu0 0.0
      %1495 = vmatprep.subr.mxu0 0.0
      %1496 = vmatpush2.xpose.msra.mxu0 0.0
      %1497 = vmatprep.subr.mxu0 0.0
      %1498 = vmatpush2.xpose.msra.mxu0 0.0
      %1499 = vmatprep.mubr.f32.mxu0 0.0
      %1500 = vmatmul.mubr.f32.gmra.mxu0 %v1426
      %v1501 = vpop.f32.mrf.mxu0
      %v1502 = vadd.f32 0.0, %v1501
      %v1503 = vpop.f32.mrf.mxu0
      %1504 = vmatprep.mubr.f32.mxu0 0.0
      %1505 = vmatmul.mubr.f32.gmra.mxu0 %v1429
      %v1506 = vpop.f32.mrf.mxu0
      %v1507 = vadd.f32 0.0, %v1506
      %v1508 = vpop.f32.mrf.mxu0
      %1509 = vdwg.mxu0
      %v1510 = vsel %vm491, %v1502, -inf
      %1511 = vmax.xlane.f32.xlu0 %v1510
      %v1512 = vpop.xlane.xlu0 %1511
      %v1513 = vsel %vm491, %v1507, -inf
      %1514 = vmax.xlane.f32.xlu0 %v1513
      %v1515 = vpop.xlane.xlu0 %1514
      %v1516 = vsub.f32 %v1502, %v1512
      %v1517 = vsub.f32 %v1507, %v1515
      %v1518 = vmul.f32 %v1516, 1.442695
      %v1519 = vpow.pop %v1518
      %v1520 = vmul.f32 %v1517, 1.442695
      %v1521 = vpow.pop %v1520
      %v1522 = vsel %vm491, %v1519, 0.0
      %1523 = vadd.xlane.f32.xlu0 %v1522
      %v1524 = vpop.xlane.xlu0 %1523
      %v1525 = vsel %vm491, %v1521, 0.0
      %1526 = vadd.xlane.f32.xlu0 %v1525
      %v1527 = vpop.xlane.xlu0 %1526
      %v1528 = vrcp.pop %v1524
      %v1529 = vrcp.pop %v1527
      %v1530 = vmul.f32 %v1519, %v1528
      %v1531 = vmul.f32 %v1521, %v1529
      %v1533 = vsel %vm491, %v1530, 0
      %v1536 = vsel %vm491, %v1531, 0
      %1538 = vmatprep.subr.mxu0 0.0
      %1539 = vmatpush1.msra.mxu0 0.0
      %1540 = vmatprep.subr.mxu0 0.0
      %1541 = vmatpush1.msra.mxu0 0.0
      %1542 = vmatprep.subr.mxu0 0.0
      %1543 = vmatpush1.msra.mxu0 0.0
      %1544 = vmatprep.subr.mxu0 0.0
      %1545 = vmatpush1.msra.mxu0 0.0
      %1546 = vmatprep.subr.mxu0 0.0
      %1547 = vmatpush1.msra.mxu0 0.0
      %1548 = vmatprep.subr.mxu0 0.0
      %1549 = vmatpush1.msra.mxu0 0.0
      %1550 = vmatprep.subr.mxu0 0.0
      %1551 = vmatpush1.msra.mxu0 0.0
      %1552 = vmatprep.subr.mxu0 0.0
      %1553 = vmatpush1.msra.mxu0 0.0
      %1554 = vmatprep.subr.mxu0 0.0
      %1555 = vmatpush1.msra.mxu0 0.0
      %1556 = vmatprep.subr.mxu0 0.0
      %1557 = vmatpush1.msra.mxu0 0.0
      %1558 = vmatprep.subr.mxu0 0.0
      %1559 = vmatpush1.msra.mxu0 0.0
      %1560 = vmatprep.subr.mxu0 0.0
      %1561 = vmatpush1.msra.mxu0 0.0
      %1562 = vmatprep.subr.mxu0 0.0
      %1563 = vmatpush1.msra.mxu0 0.0
      %1564 = vmatprep.subr.mxu0 0.0
      %1565 = vmatpush1.msra.mxu0 0.0
      %1566 = vmatprep.subr.mxu0 0.0
      %1567 = vmatpush1.msra.mxu0 %v1333
      %1568 = vmatprep.subr.mxu0 0.0
      %1569 = vmatpush1.msra.mxu0 %v1332
      %1570 = vmatprep.subr.mxu0 0.0
      %1571 = vmatpush2.msra.mxu0 0.0
      %1572 = vmatprep.subr.mxu0 0.0
      %1573 = vmatpush2.msra.mxu0 0.0
      %1574 = vmatprep.subr.mxu0 0.0
      %1575 = vmatpush2.msra.mxu0 0.0
      %1576 = vmatprep.subr.mxu0 0.0
      %1577 = vmatpush2.msra.mxu0 0.0
      %1578 = vmatprep.subr.mxu0 0.0
      %1579 = vmatpush2.msra.mxu0 0.0
      %1580 = vmatprep.subr.mxu0 0.0
      %1581 = vmatpush2.msra.mxu0 0.0
      %1582 = vmatprep.subr.mxu0 0.0
      %1583 = vmatpush2.msra.mxu0 0.0
      %1584 = vmatprep.subr.mxu0 0.0
      %1585 = vmatpush2.msra.mxu0 0.0
      %1586 = vmatprep.subr.mxu0 0.0
      %1587 = vmatpush2.msra.mxu0 0.0
      %1588 = vmatprep.subr.mxu0 0.0
      %1589 = vmatpush2.msra.mxu0 0.0
      %1590 = vmatprep.subr.mxu0 0.0
      %1591 = vmatpush2.msra.mxu0 0.0
      %1592 = vmatprep.subr.mxu0 0.0
      %1593 = vmatpush2.msra.mxu0 0.0
      %1594 = vmatprep.subr.mxu0 0.0
      %1595 = vmatpush2.msra.mxu0 0.0
      %1596 = vmatprep.subr.mxu0 0.0
      %1597 = vmatpush2.msra.mxu0 0.0
      %1598 = vmatprep.subr.mxu0 0.0
      %1599 = vmatpush2.msra.mxu0 0.0
      %1600 = vmatprep.subr.mxu0 0.0
      %1601 = vmatpush2.msra.mxu0 0.0
      %1602 = vmatprep.mubr.f32.mxu0 0.0
      %1603 = vmatmul.mubr.f32.gmra.mxu0 %v1533
      %v1604 = vpop.f32.mrf.mxu0
      %v1605 = vadd.f32 0.0, %v1604
      %v1606 = vpop.f32.mrf.mxu0
      %1607 = vmatprep.mubr.f32.mxu0 0.0
      %1608 = vmatmul.mubr.f32.gmra.mxu0 %v1536
      %v1609 = vpop.f32.mrf.mxu0
      %v1610 = vadd.f32 0.0, %v1609
      %v1611 = vpop.f32.mrf.mxu0
      %1612 = vdwg.mxu0
      %1613 = vst.msk [vmem:[#allocation3] sm:$0xff] %vm407, %v1605
      %1614 = vst.msk [vmem:[#allocation3 + $0x8] sm:$0xff] %vm407, %v1610
      %v1615 = vld [vmem:[#allocation3] sm:$0xf]
      %1616 = vst.msk [vmem:[%s284 + $0xc] sm:$0xf] %vm685, %v1615
      %v1617 = vld [vmem:[#allocation3 + $0x4] sm:$0xf]
      %1619 = vrot.lane.b32.xlu0 %v1617, 8
      %v1620 = vpop.permute.xlu0 %1619
      %1622 = vst.msk [vmem:[%s284 + $0xc] sm:$0xf] %vm692, %v1620
      %v1623 = vld [vmem:[#allocation3 + $0x8] sm:$0xf]
      %1625 = vrot.lane.b32.xlu0 %v1623, 16
      %v1626 = vpop.permute.xlu0 %1625
      %1628 = vst.msk [vmem:[%s284 + $0xc] sm:$0xf] %vm699, %v1626
      %v1629 = vld [vmem:[#allocation3 + $0xc] sm:$0xf]
      %1631 = vrot.lane.b32.xlu0 %v1629, 24
      %v1632 = vpop.permute.xlu0 %1631
      %1634 = vst.msk [vmem:[%s284 + $0xc] sm:$0xf] %vm706, %v1632
      %s1635 = smul.u32 2, %s16
      %p1636 = scmp.lt.s32.totalorder %s1635, 3
      %s1637 = scalar_select %p1636, %s1635, 3
      %s1638 = smul.addr %s1637, 8
      %s1639 = scalar_lea.vmem %s5, %s1638
      // Predicated region
      $region41: #{multi_head_attention_layer.2} parent=39 // pred_check
        %p1640 = pneg %p159
      $region42: #{multi_head_attention_layer.2} parent=39 // pred_check_branch
        %1642 = sbr.rel (%p1640) target = $region44
      $region43: #{multi_head_attention_layer.2} parent=39 // pred_region
        %s1643 = smul.u32 2, %s16
      $region44: #{multi_head_attention_layer.2} parent=39 // pred_fallthru
        _
    $region40: #{multi_head_attention_layer.2} parent=5 // pred_fallthru
      _
    %p1644 = scmp.le.s32.totalorder 2, %s11
    // Predicated region
    $region45: #{multi_head_attention_layer.2} parent=5 // pred_check
      %p1645 = pneg %p1644
    $region46: #{multi_head_attention_layer.2} parent=5 // pred_check_branch
      %1647 = sbr.rel (%p1645) target = $region48
    $region47: #{multi_head_attention_layer.2} parent=5 // pred_region
      %s1648 = ssub.s32 %s11, 2
      // Predicated region
      $region49: #{multi_head_attention_layer.2} parent=47 // pred_check
        %p1649 = pneg %p165
      $region50: #{multi_head_attention_layer.2} parent=47 // pred_check_branch
        %1651 = sbr.rel (%p1649) target = $region52
      $region51: #{multi_head_attention_layer.2} parent=47 // pred_region
        %s1652 = smul.u32 2, %s17
        %p1653 = scmp.lt.s32.totalorder %s1652, 3
        %s1654 = scalar_select %p1653, %s1652, 3
        %s1655 = smul.addr %s1654, 8
        %s1656 = scalar_lea.vmem %s5, %s1655
      $region52: #{multi_head_attention_layer.2} parent=47 // pred_fallthru
        _
    $region48: #{multi_head_attention_layer.2} parent=5 // pred_fallthru
      _
  $region6: #{multi_head_attention_layer.2} parent=0 // loop_footer
    %s15 = sadd.s32 1, %s11
  $region7: #{multi_head_attention_layer.2} parent=0 // loop_footer_branch
    %10 = sbr.rel target = $region3
  $region8: #{multi_head_attention_layer.2} parent=0 // loop_exit
    _

</llo_original>
